<compile_context>
chip_gen: v7x
topology: tpu7x:2x2x1
jax: 0.10.0
libtpu: 0.0.40
codegen_flags: <defaults>
</compile_context>

<pallas_src>
import functools

import jax
import jax.numpy as jnp
from jax.experimental import pallas as pl
from jax.experimental.pallas import tpu as pltpu

ALPHA = 0.2          # LeakyReLU negative slope (module default)
NEG_INF = -9.0e15    # same non-edge mask constant as the torch code
MAX_BLOCK_B = 128    # graphs per grid step (rows per matmul = MAX_BLOCK_B * N)


def _pad8(n):
    return -(-n // 8) * 8


def _nodes_to_lanes(x3):
    """(BLOCK_B, N, D) -> (BLOCK_B, N*D) via static per-node lane concat.

    Avoids a generic minor-dim reshape (may round-trip VMEM); the N slices +
    concat stay on the XLU and produce a lane-dense row per graph.
    """
    n = x3.shape[1]
    return jnp.concatenate([x3[:, i, :] for i in range(n)], axis=-1)


def _expm1_neg(z):
    """expm1 for z <= 0 with only Mosaic-guaranteed ops (exp/mul/add/where).

    exp(z)-1 cancels catastrophically near 0, so switch to a cubic Taylor
    series there; matches torch.expm1 to f32 precision (review fix)."""
    em1 = jnp.exp(z) - 1.0
    series = z * (1.0 + z * (0.5 + z * (1.0 / 6.0)))
    return jnp.where(z > -1e-2, series, em1)


# ------------------------------ fused kernel -------------------------------- #

def _gat_agent_kernel(x_ref, adj_ref, p_ref, act_out_ref, h_out_ref, *,
                      block_b, n_nodes, f_in, hidden, e_dim, n_heads,
                      n_actions, offs, alpha):
    N = n_nodes
    R = block_b * N
    HE = n_heads * e_dim
    o = offs

    # -- static slices into the single packed parameter slab (one DMA total) --
    enc_w = p_ref[o["enc_w"]:o["enc_w"] + f_in, :hidden]
    wcat = p_ref[o["wcat"]:o["wcat"] + hidden, :HE]
    acol = p_ref[o["acol"]:o["acol"] + HE, :2 * n_heads]
    act_w = p_ref[o["act_w"]:o["act_w"] + hidden, :n_actions]
    enc_b = p_ref[o["enc_b"]:o["enc_b"] + 1, :hidden]
    pol_b = p_ref[o["pol_b"]:o["pol_b"] + 1, :hidden]
    act_b = p_ref[o["act_b"]:o["act_b"] + 1, :n_actions]

    # ---- encoder: Linear + ReLU over all BLOCK_B*N rows at once -------------
    x = x_ref[...]                                                    # (R, F_in)
    h = jnp.maximum(
        jnp.dot(x, enc_w, preferred_element_type=jnp.float32) + enc_b, 0.0)

    # ---- all heads' Wh in one wide MXU matmul --------------------------------
    wh_all = jnp.dot(h, wcat, preferred_element_type=jnp.float32)     # (R, HE)

    # ---- both heads' score halves in ONE matmul (block-diagonal [a1|a2]) ----
    f_all = jnp.dot(wh_all, acol, preferred_element_type=jnp.float32)  # (R, 2*heads)
    f_b = f_all.reshape(block_b, N, 2 * n_heads)       # leading-dim split: free

    adj = adj_ref[...]                                                # (b, N, N)

    # ---- heads: masked softmax attention; accumulate straight into policy ---
    hh_acc = jnp.zeros((R, hidden), jnp.float32)
    for hd in range(n_heads):                                         # static unroll
        lo = hd * e_dim
        wh = wh_all[:, lo:lo + e_dim].reshape(block_b, N, e_dim)      # (b, N, E)
        f_i = f_b[:, :, 2 * hd:2 * hd + 1]                            # (b, N, 1)
        f_j = _nodes_to_lanes(f_b[:, :, 2 * hd + 1:2 * hd + 2])       # (b, N) on lanes
        e = f_i + f_j[:, None, :]                                     # (b, N, N)
        e = jnp.where(e > 0, e, alpha * e)                            # LeakyReLU
        e = jnp.where(adj > 0, e, NEG_INF)                            # mask non-edges
        # NOTE: a fully-masked row degenerates to a uniform distribution,
        # exactly like the torch code (harness adds self-loops).
        e = e - jnp.max(e, axis=-1, keepdims=True)                    # lane-axis softmax
        p = jnp.exp(e)
        attn = p / jnp.sum(p, axis=-1, keepdims=True)
        hp = jnp.einsum("bij,bje->bie", attn, wh,
                        preferred_element_type=jnp.float32)           # (b, N, E)
        hp = jnp.where(hp > 0, hp, _expm1_neg(jnp.minimum(hp, 0.0)))  # exact ELU
        # per-head partial policy matmul (replaces head concat + one big matmul)
        pol_w_hd = p_ref[o["pol_w"] + lo:o["pol_w"] + lo + e_dim, :hidden]
        hh_acc = hh_acc + jnp.dot(hp.reshape(R, e_dim), pol_w_hd,
                                  preferred_element_type=jnp.float32)

    # ---- policy ReLU + actions Linear ----------------------------------------
    hh = jnp.maximum(hh_acc + pol_b, 0.0)                             # (R, hidden)
    acts = jnp.dot(hh, act_w, preferred_element_type=jnp.float32) + act_b

    # ---- lane-dense output slabs (free row-major re-view in the wrapper) ----
    h_out_ref[...] = _nodes_to_lanes(hh.reshape(block_b, N, hidden))
    act_out_ref[...] = _nodes_to_lanes(acts.reshape(block_b, N, n_actions))


# --------------------------- parameter packing ------------------------------- #

def _pack_params(params):
    """Pack every weight/bias into one f32 slab (rows padded to 8)."""
    f_in, hidden = params["enc_w"].shape
    n_heads = len(params["att_W"])
    e_dim = params["att_W"][0].shape[1]
    n_actions = params["act_w"].shape[1]
    HE = n_heads * e_dim
    cols = max(hidden, HE, 2 * n_heads, n_actions)

    # block-diagonal [a1 | a2] columns per head -> one matmul gives all scores
    acol = jnp.zeros((HE, 2 * n_heads), jnp.float32)
    for hd, a in enumerate(params["att_a"]):
        acol = acol.at[hd * e_dim:(hd + 1) * e_dim, 2 * hd].set(a[:e_dim, 0])
        acol = acol.at[hd * e_dim:(hd + 1) * e_dim, 2 * hd + 1].set(a[e_dim:, 0])

    mats = [("enc_w", params["enc_w"]),
            ("wcat", jnp.concatenate(params["att_W"], axis=-1)),
            ("acol", acol),
            ("pol_w", params["pol_w"]),
            ("act_w", params["act_w"]),
            ("enc_b", params["enc_b"].reshape(1, hidden)),
            ("pol_b", params["pol_b"].reshape(1, hidden)),
            ("act_b", params["act_b"].reshape(1, n_actions))]

    offs, blocks, row = {}, [], 0
    for name, m in mats:
        r, c = m.shape
        rp = _pad8(r)                       # keep every section sublane-aligned
        blocks.append(jnp.zeros((rp, cols), jnp.float32).at[:r, :c].set(m))
        offs[name] = row
        row += rp
    slab = jnp.concatenate(blocks, axis=0)  # one VMEM operand, one DMA
    meta = dict(f_in=f_in, hidden=hidden, n_heads=n_heads, e_dim=e_dim,
                n_actions=n_actions)
    return slab, offs, meta


# --------------------------- forward pass (glue) ----------------------------- #

def gat_agent_forward(params, x, adj):
    """Returns (actions, h) exactly like GATAgent.forward (dropout = 0)."""
    if adj.ndim == 2:
        adj = adj[None]
    B, N, _ = adj.shape
    slab, offs, meta = _pack_params(params)
    f_in, hidden = meta["f_in"], meta["hidden"]
    n_heads, e_dim, n_actions = meta["n_heads"], meta["e_dim"], meta["n_actions"]
    HE = n_heads * e_dim

    # ---- batch blocking: amortize per-grid-step cost and fill the MXU -------
    block_b = min(B, MAX_BLOCK_B)
    num_blocks = -(-B // block_b)
    b_pad = num_blocks * block_b
    if b_pad != B:  # zero-padded graphs: all-masked rows -> finite, discarded
        x = jnp.pad(x, ((0, (b_pad - B) * N), (0, 0)))
        adj = jnp.pad(adj, ((0, b_pad - B), (0, 0), (0, 0)))
    rows = block_b * N

    kernel = functools.partial(
        _gat_agent_kernel, block_b=block_b, n_nodes=N, f_in=f_in,
        hidden=hidden, e_dim=e_dim, n_heads=n_heads, n_actions=n_actions,
        offs=offs, alpha=ALPHA)

    flops = (2 * b_pad * N * (f_in * hidden + hidden * HE + HE * 2 * n_heads
                              + HE * hidden + hidden * n_actions)
             + 2 * b_pad * n_heads * N * N * (e_dim + 2))
    transcendentals = b_pad * n_heads * N * (N + e_dim)
    bytes_accessed = 4 * (x.size + adj.size + slab.size
                          + b_pad * N * (hidden + n_actions))

    act_slab, h_slab = pl.pallas_call(
        kernel,
        out_shape=(jax.ShapeDtypeStruct((b_pad, N * n_actions), jnp.float32),
                   jax.ShapeDtypeStruct((b_pad, N * hidden), jnp.float32)),
        grid=(num_blocks,),
        in_specs=[
            pl.BlockSpec((rows, f_in), lambda g: (g, 0)),        # x rows, block g
            pl.BlockSpec((block_b, N, N), lambda g: (g, 0, 0)),  # adj graphs, block g
            pl.BlockSpec(slab.shape, lambda g: (0, 0)),          # packed params (resident)
        ],
        out_specs=(
            pl.BlockSpec((block_b, N * n_actions), lambda g: (g, 0)),
            pl.BlockSpec((block_b, N * hidden), lambda g: (g, 0)),
        ),
        compiler_params=pltpu.CompilerParams(
            dimension_semantics=(("parallel",) if num_blocks > 1
                                 else ("arbitrary",))),
        cost_estimate=pl.CostEstimate(flops=flops,
                                      transcendentals=transcendentals,
                                      bytes_accessed=bytes_accessed),
    )(x, adj, slab)

    # The lane-dense slabs share HBM layout with the flat views: free reshape.
    actions = act_slab.reshape(b_pad * N, n_actions)[:B * N]
    h = h_slab.reshape(b_pad * N, hidden)[:B * N]
    return actions, h


# ------------------------------ reference ------------------------------------ #

def reference_forward(params, x, adj):
    """Pure-JAX mirror of the PyTorch math (for correctness check)."""
    B, N, _ = adj.shape
    with jax.default_matmul_precision("highest"):
        h = jax.nn.relu(x @ params["enc_w"] + params["enc_b"]).reshape(B, N, -1)
        outs = []
        for W, a in zip(params["att_W"], params["att_a"]):
            Wh = h @ W
            E = Wh.shape[-1]
            Wh_i = jnp.repeat(Wh, N, axis=1)          # repeat_interleave(dim=1)
            Wh_j = jnp.tile(Wh, (1, N, 1))            # repeat(1, M, 1)
            a_input = jnp.concatenate([Wh_i, Wh_j], -1).reshape(B, N, N, 2 * E)
            e = (a_input @ a)[..., 0]
            e = jnp.where(e > 0, e, ALPHA * e)
            att = jnp.where(adj > 0, e, NEG_INF)
            att = jax.nn.softmax(att, axis=-1)
            hp = att @ Wh
            outs.append(jnp.where(hp > 0, hp, jnp.expm1(hp)))   # torch F.elu
        hflat = jnp.concatenate(outs, -1).reshape(B * N, -1)
        hh = jax.nn.relu(hflat @ params["pol_w"] + params["pol_b"])
        acts = hh @ params["act_w"] + params["act_b"]
    return acts, hh


# ------------------------------ param init ----------------------------------- #

def xavier_uniform(key, shape, gain=1.414):
    fan_in, fan_out = shape[0], shape[1]
    bound = gain * (6.0 / (fan_in + fan_out)) ** 0.5
    return jax.random.uniform(key, shape, jnp.float32, -bound, bound)


def init_params(key, f_in, hidden, msg_hidden, n_heads, n_actions):
    ks = jax.random.split(key, 6 + 2 * n_heads)
    return {
        "enc_w": xavier_uniform(ks[0], (f_in, hidden)),
        "enc_b": jnp.zeros((hidden,), jnp.float32),
        "att_W": [xavier_uniform(ks[2 + 2 * i], (hidden, msg_hidden)) for i in range(n_heads)],
        "att_a": [xavier_uniform(ks[3 + 2 * i], (2 * msg_hidden, 1)) for i in range(n_heads)],
        "pol_w": xavier_uniform(ks[2 + 2 * n_heads], (msg_hidden * n_heads, hidden)),
        "pol_b": jnp.zeros((hidden,), jnp.float32),
        "act_w": xavier_uniform(ks[3 + 2 * n_heads], (hidden, n_actions)),
        "act_b": jnp.zeros((n_actions,), jnp.float32),
    }


# --------------------------------- main --------------------------------------- #

if __name__ == "__main__":
    # args: hidden_dim=32, msg_hidden_dim=32, n_heads=2, n_actions=8, num_layers=1
    B, N, F_IN = 2, 8, 16
    HIDDEN, MSG_HIDDEN, N_HEADS, N_ACTIONS = 32, 32, 2, 8

    key = jax.random.PRNGKey(0)
    kp, kx, ka = jax.random.split(key, 3)

    params = init_params(kp, F_IN, HIDDEN, MSG_HIDDEN, N_HEADS, N_ACTIONS)

    x = jax.random.normal(kx, (B * N, F_IN), jnp.float32)
    adj = (jax.random.uniform(ka, (B, N, N)) > 0.5).astype(jnp.float32)
    adj = jnp.maximum(adj, jnp.eye(N, dtype=jnp.float32)[None])   # self-loops

    actions, h_feat = gat_agent_forward(params, x, adj)
    jax.block_until_ready((actions, h_feat))

    ref_actions, ref_h = reference_forward(params, x, adj)
    assert actions.shape == (B * N, N_ACTIONS) and h_feat.shape == (B * N, HIDDEN)
    # Tolerance sized for TPU f32 matmul precision differences between the
    # Mosaic kernel and the XLA reference (default f32 dots may use bf16 passes).
    assert jnp.allclose(actions, ref_actions, rtol=2e-2, atol=2e-2), \
        float(jnp.max(jnp.abs(actions - ref_actions)))
    assert jnp.allclose(h_feat, ref_h, rtol=2e-2, atol=2e-2), \
        float(jnp.max(jnp.abs(h_feat - ref_h)))

    print("KERNEL_OK")
</pallas_src>

<mosaic_0001>
module attributes {stable_mosaic.version = 11 : i64} {
  func.func @_gat_agent_kernel(%arg0: i32, %arg1: memref<16x16xf32, #tpu.memory_space<vmem>>, %arg2: memref<2x8x8xf32, #tpu.memory_space<vmem>>, %arg3: memref<232x64xf32, #tpu.memory_space<vmem>>, %arg4: memref<2x64xf32, #tpu.memory_space<vmem>>, %arg5: memref<2x256xf32, #tpu.memory_space<vmem>>) attributes {dimension_semantics = [#tpu.dimension_semantics<arbitrary>], iteration_bounds = array<i64: 1>, scalar_prefetch = 0 : i64, scratch_operands = 0 : i64, tpu.core_type = #tpu.core_type<tc>, window_params = [{transform_indices = @transform_0, window_bounds = array<i64: 16, 16>}, {transform_indices = @transform_1, window_bounds = array<i64: 2, 8, 8>}, {pipeline_mode = #tpu.pipeline_mode<synchronous>, transform_indices = @transform_2, window_bounds = array<i64: 232, 64>}, {transform_indices = @transform_3, window_bounds = array<i64: 2, 64>}, {transform_indices = @transform_4, window_bounds = array<i64: 2, 256>}]} {
    %c0 = arith.constant 0 : index
    %c0_0 = arith.constant 0 : index
    %0 = vector.load %arg3[%c0, %c0_0] : memref<232x64xf32, #tpu.memory_space<vmem>>, vector<16x32xf32>
    %c16 = arith.constant 16 : index
    %c0_1 = arith.constant 0 : index
    %1 = vector.load %arg3[%c16, %c0_1] : memref<232x64xf32, #tpu.memory_space<vmem>>, vector<32x64xf32>
    %c48 = arith.constant 48 : index
    %c0_2 = arith.constant 0 : index
    %2 = vector.load %arg3[%c48, %c0_2] : memref<232x64xf32, #tpu.memory_space<vmem>>, vector<64x4xf32>
    %c176 = arith.constant 176 : index
    %c0_3 = arith.constant 0 : index
    %3 = vector.load %arg3[%c176, %c0_3] : memref<232x64xf32, #tpu.memory_space<vmem>>, vector<32x8xf32>
    %c208 = arith.constant 208 : index
    %c0_4 = arith.constant 0 : index
    %4 = vector.load %arg3[%c208, %c0_4] : memref<232x64xf32, #tpu.memory_space<vmem>>, vector<1x32xf32>
    %c216 = arith.constant 216 : index
    %c0_5 = arith.constant 0 : index
    %5 = vector.load %arg3[%c216, %c0_5] : memref<232x64xf32, #tpu.memory_space<vmem>>, vector<1x32xf32>
    %c224 = arith.constant 224 : index
    %c0_6 = arith.constant 0 : index
    %6 = vector.load %arg3[%c224, %c0_6] : memref<232x64xf32, #tpu.memory_space<vmem>>, vector<1x8xf32>
    %c0_7 = arith.constant 0 : index
    %c0_8 = arith.constant 0 : index
    %7 = vector.load %arg1[%c0_7, %c0_8] : memref<16x16xf32, #tpu.memory_space<vmem>>, vector<16x16xf32>
    %cst = arith.constant dense<0.000000e+00> : vector<16x32xf32>
    %8 = tpu.matmul %7, %0, %cst {dimension_numbers = #tpu.dot_dimension_numbers<[1], [0], [0], [1], [0, 0, 1, 1], [], []>} : vector<16x16xf32>, vector<16x32xf32>, vector<16x32xf32> -> vector<16x32xf32>
    %9 = vector.broadcast %4 : vector<1x32xf32> to vector<16x32xf32>
    %10 = arith.addf %8, %9 : vector<16x32xf32>
    %cst_9 = arith.constant 0.000000e+00 : f32
    %11 = vector.broadcast %cst_9 : f32 to vector<16x32xf32>
    %12 = arith.maximumf %10, %11 : vector<16x32xf32>
    %cst_10 = arith.constant dense<0.000000e+00> : vector<16x64xf32>
    %13 = tpu.matmul %12, %1, %cst_10 {dimension_numbers = #tpu.dot_dimension_numbers<[1], [0], [0], [1], [0, 0, 1, 1], [], []>} : vector<16x32xf32>, vector<32x64xf32>, vector<16x64xf32> -> vector<16x64xf32>
    %cst_11 = arith.constant dense<0.000000e+00> : vector<16x4xf32>
    %14 = tpu.matmul %13, %2, %cst_11 {dimension_numbers = #tpu.dot_dimension_numbers<[1], [0], [0], [1], [0, 0, 1, 1], [], []>} : vector<16x64xf32>, vector<64x4xf32>, vector<16x4xf32> -> vector<16x4xf32>
    %15 = vector.shape_cast %14 : vector<16x4xf32> to vector<2x8x4xf32>
    %c0_12 = arith.constant 0 : index
    %c0_13 = arith.constant 0 : index
    %c0_14 = arith.constant 0 : index
    %16 = vector.load %arg2[%c0_12, %c0_13, %c0_14] : memref<2x8x8xf32, #tpu.memory_space<vmem>>, vector<2x8x8xf32>
    %cst_15 = arith.constant 0.000000e+00 : f32
    %17 = vector.broadcast %cst_15 : f32 to vector<16x32xf32>
    %18 = vector.extract_strided_slice %13 {offsets = [0, 0], sizes = [16, 32], strides = [1, 1]} : vector<16x64xf32> to vector<16x32xf32>
    %19 = vector.shape_cast %18 : vector<16x32xf32> to vector<2x8x32xf32>
    %20 = vector.extract_strided_slice %15 {offsets = [0, 0, 0], sizes = [2, 8, 1], strides = [1, 1, 1]} : vector<2x8x4xf32> to vector<2x8x1xf32>
    %21 = vector.extract_strided_slice %15 {offsets = [0, 0, 1], sizes = [2, 8, 1], strides = [1, 1, 1]} : vector<2x8x4xf32> to vector<2x8x1xf32>
    %22 = vector.extract_strided_slice %21 {offsets = [0, 0, 0], sizes = [2, 1, 1], strides = [1, 1, 1]} : vector<2x8x1xf32> to vector<2x1x1xf32>
    %23 = vector.shape_cast %22 : vector<2x1x1xf32> to vector<2x1xf32>
    %24 = vector.extract_strided_slice %21 {offsets = [0, 1, 0], sizes = [2, 1, 1], strides = [1, 1, 1]} : vector<2x8x1xf32> to vector<2x1x1xf32>
    %25 = vector.shape_cast %24 : vector<2x1x1xf32> to vector<2x1xf32>
    %26 = vector.extract_strided_slice %21 {offsets = [0, 2, 0], sizes = [2, 1, 1], strides = [1, 1, 1]} : vector<2x8x1xf32> to vector<2x1x1xf32>
    %27 = vector.shape_cast %26 : vector<2x1x1xf32> to vector<2x1xf32>
    %28 = vector.extract_strided_slice %21 {offsets = [0, 3, 0], sizes = [2, 1, 1], strides = [1, 1, 1]} : vector<2x8x1xf32> to vector<2x1x1xf32>
    %29 = vector.shape_cast %28 : vector<2x1x1xf32> to vector<2x1xf32>
    %30 = vector.extract_strided_slice %21 {offsets = [0, 4, 0], sizes = [2, 1, 1], strides = [1, 1, 1]} : vector<2x8x1xf32> to vector<2x1x1xf32>
    %31 = vector.shape_cast %30 : vector<2x1x1xf32> to vector<2x1xf32>
    %32 = vector.extract_strided_slice %21 {offsets = [0, 5, 0], sizes = [2, 1, 1], strides = [1, 1, 1]} : vector<2x8x1xf32> to vector<2x1x1xf32>
    %33 = vector.shape_cast %32 : vector<2x1x1xf32> to vector<2x1xf32>
    %34 = vector.extract_strided_slice %21 {offsets = [0, 6, 0], sizes = [2, 1, 1], strides = [1, 1, 1]} : vector<2x8x1xf32> to vector<2x1x1xf32>
    %35 = vector.shape_cast %34 : vector<2x1x1xf32> to vector<2x1xf32>
    %36 = vector.extract_strided_slice %21 {offsets = [0, 7, 0], sizes = [2, 1, 1], strides = [1, 1, 1]} : vector<2x8x1xf32> to vector<2x1x1xf32>
    %37 = vector.shape_cast %36 : vector<2x1x1xf32> to vector<2x1xf32>
    %38 = tpu.concatenate %23, %25, %27, %29, %31, %33, %35, %37 in 1 : vector<2x1xf32>, vector<2x1xf32>, vector<2x1xf32>, vector<2x1xf32>, vector<2x1xf32>, vector<2x1xf32>, vector<2x1xf32>, vector<2x1xf32> -> vector<2x8xf32>
    %39 = vector.shape_cast %38 : vector<2x8xf32> to vector<2x1x8xf32>
    %40 = vector.broadcast %20 : vector<2x8x1xf32> to vector<2x8x8xf32>
    %41 = vector.broadcast %39 : vector<2x1x8xf32> to vector<2x8x8xf32>
    %42 = arith.addf %40, %41 : vector<2x8x8xf32>
    %cst_16 = arith.constant 0.000000e+00 : f32
    %43 = vector.broadcast %cst_16 : f32 to vector<2x8x8xf32>
    %44 = arith.cmpf ogt, %42, %43 : vector<2x8x8xf32>
    %cst_17 = arith.constant 2.000000e-01 : f32
    %45 = vector.broadcast %cst_17 : f32 to vector<2x8x8xf32>
    %46 = arith.mulf %45, %42 : vector<2x8x8xf32>
    %47 = arith.select %44, %42, %46 : vector<2x8x8xi1>, vector<2x8x8xf32>
    %cst_18 = arith.constant 0.000000e+00 : f32
    %48 = vector.broadcast %cst_18 : f32 to vector<2x8x8xf32>
    %49 = arith.cmpf ogt, %16, %48 : vector<2x8x8xf32>
    %cst_19 = arith.constant -9.000000e+15 : f32
    %50 = vector.broadcast %cst_19 : f32 to vector<2x8x8xf32>
    %51 = arith.select %49, %47, %50 : vector<2x8x8xi1>, vector<2x8x8xf32>
    %cst_20 = arith.constant dense<0xFF800000> : vector<2x8xf32>
    %52 = vector.multi_reduction <maximumf>, %51, %cst_20 [2] : vector<2x8x8xf32> to vector<2x8xf32>
    %53 = vector.shape_cast %52 : vector<2x8xf32> to vector<2x8x1xf32>
    %54 = vector.broadcast %53 : vector<2x8x1xf32> to vector<2x8x8xf32>
    %55 = arith.subf %51, %54 : vector<2x8x8xf32>
    %56 = math.exp %55 : vector<2x8x8xf32>
    %cst_21 = arith.constant dense<0.000000e+00> : vector<2x8xf32>
    %57 = vector.multi_reduction <add>, %56, %cst_21 [2] : vector<2x8x8xf32> to vector<2x8xf32>
    %58 = vector.shape_cast %57 : vector<2x8xf32> to vector<2x8x1xf32>
    %59 = vector.broadcast %58 : vector<2x8x1xf32> to vector<2x8x8xf32>
    %60 = arith.divf %56, %59 : vector<2x8x8xf32>
    "tpu.trace_start"() <{level = 10 : i32, message = "bij,bje->bie"}> : () -> ()
    %cst_22 = arith.constant dense<0.000000e+00> : vector<2x8x32xf32>
    %61 = tpu.matmul %60, %19, %cst_22 {dimension_numbers = #tpu.dot_dimension_numbers<[2], [1], [1], [2], [0, 0, 0, 1, 1, 2], [0], [0]>} : vector<2x8x8xf32>, vector<2x8x32xf32>, vector<2x8x32xf32> -> vector<2x8x32xf32>
    %cst_23 = arith.constant 0.000000e+00 : f32
    "tpu.trace_stop"() : () -> ()
    %62 = vector.broadcast %cst_23 : f32 to vector<2x8x32xf32>
    %63 = arith.cmpf ogt, %61, %62 : vector<2x8x32xf32>
    %cst_24 = arith.constant 0.000000e+00 : f32
    %64 = vector.broadcast %cst_24 : f32 to vector<2x8x32xf32>
    %65 = arith.minimumf %61, %64 : vector<2x8x32xf32>
    %66 = math.exp %65 : vector<2x8x32xf32>
    %cst_25 = arith.constant 1.000000e+00 : f32
    %67 = vector.broadcast %cst_25 : f32 to vector<2x8x32xf32>
    %68 = arith.subf %66, %67 : vector<2x8x32xf32>
    %cst_26 = arith.constant 0.166666672 : f32
    %69 = vector.broadcast %cst_26 : f32 to vector<2x8x32xf32>
    %70 = arith.mulf %65, %69 : vector<2x8x32xf32>
    %cst_27 = arith.constant 5.000000e-01 : f32
    %71 = vector.broadcast %cst_27 : f32 to vector<2x8x32xf32>
    %72 = arith.addf %71, %70 : vector<2x8x32xf32>
    %73 = arith.mulf %65, %72 : vector<2x8x32xf32>
    %cst_28 = arith.constant 1.000000e+00 : f32
    %74 = vector.broadcast %cst_28 : f32 to vector<2x8x32xf32>
    %75 = arith.addf %74, %73 : vector<2x8x32xf32>
    %76 = arith.mulf %65, %75 : vector<2x8x32xf32>
    %cst_29 = arith.constant -0.00999999977 : f32
    %77 = vector.broadcast %cst_29 : f32 to vector<2x8x32xf32>
    %78 = arith.cmpf ogt, %65, %77 : vector<2x8x32xf32>
    %79 = arith.select %78, %76, %68 : vector<2x8x32xi1>, vector<2x8x32xf32>
    %80 = arith.select %63, %61, %79 : vector<2x8x32xi1>, vector<2x8x32xf32>
    %c112 = arith.constant 112 : index
    %c0_30 = arith.constant 0 : index
    %81 = vector.load %arg3[%c112, %c0_30] : memref<232x64xf32, #tpu.memory_space<vmem>>, vector<32x32xf32>
    %82 = vector.shape_cast %80 : vector<2x8x32xf32> to vector<16x32xf32>
    %cst_31 = arith.constant dense<0.000000e+00> : vector<16x32xf32>
    %83 = tpu.matmul %82, %81, %cst_31 {dimension_numbers = #tpu.dot_dimension_numbers<[1], [0], [0], [1], [0, 0, 1, 1], [], []>} : vector<16x32xf32>, vector<32x32xf32>, vector<16x32xf32> -> vector<16x32xf32>
    %84 = arith.addf %17, %83 : vector<16x32xf32>
    %85 = vector.extract_strided_slice %13 {offsets = [0, 32], sizes = [16, 32], strides = [1, 1]} : vector<16x64xf32> to vector<16x32xf32>
    %86 = vector.shape_cast %85 : vector<16x32xf32> to vector<2x8x32xf32>
    %87 = vector.extract_strided_slice %15 {offsets = [0, 0, 2], sizes = [2, 8, 1], strides = [1, 1, 1]} : vector<2x8x4xf32> to vector<2x8x1xf32>
    %88 = vector.extract_strided_slice %15 {offsets = [0, 0, 3], sizes = [2, 8, 1], strides = [1, 1, 1]} : vector<2x8x4xf32> to vector<2x8x1xf32>
    %89 = vector.extract_strided_slice %88 {offsets = [0, 0, 0], sizes = [2, 1, 1], strides = [1, 1, 1]} : vector<2x8x1xf32> to vector<2x1x1xf32>
    %90 = vector.shape_cast %89 : vector<2x1x1xf32> to vector<2x1xf32>
    %91 = vector.extract_strided_slice %88 {offsets = [0, 1, 0], sizes = [2, 1, 1], strides = [1, 1, 1]} : vector<2x8x1xf32> to vector<2x1x1xf32>
    %92 = vector.shape_cast %91 : vector<2x1x1xf32> to vector<2x1xf32>
    %93 = vector.extract_strided_slice %88 {offsets = [0, 2, 0], sizes = [2, 1, 1], strides = [1, 1, 1]} : vector<2x8x1xf32> to vector<2x1x1xf32>
    %94 = vector.shape_cast %93 : vector<2x1x1xf32> to vector<2x1xf32>
    %95 = vector.extract_strided_slice %88 {offsets = [0, 3, 0], sizes = [2, 1, 1], strides = [1, 1, 1]} : vector<2x8x1xf32> to vector<2x1x1xf32>
    %96 = vector.shape_cast %95 : vector<2x1x1xf32> to vector<2x1xf32>
    %97 = vector.extract_strided_slice %88 {offsets = [0, 4, 0], sizes = [2, 1, 1], strides = [1, 1, 1]} : vector<2x8x1xf32> to vector<2x1x1xf32>
    %98 = vector.shape_cast %97 : vector<2x1x1xf32> to vector<2x1xf32>
    %99 = vector.extract_strided_slice %88 {offsets = [0, 5, 0], sizes = [2, 1, 1], strides = [1, 1, 1]} : vector<2x8x1xf32> to vector<2x1x1xf32>
    %100 = vector.shape_cast %99 : vector<2x1x1xf32> to vector<2x1xf32>
    %101 = vector.extract_strided_slice %88 {offsets = [0, 6, 0], sizes = [2, 1, 1], strides = [1, 1, 1]} : vector<2x8x1xf32> to vector<2x1x1xf32>
    %102 = vector.shape_cast %101 : vector<2x1x1xf32> to vector<2x1xf32>
    %103 = vector.extract_strided_slice %88 {offsets = [0, 7, 0], sizes = [2, 1, 1], strides = [1, 1, 1]} : vector<2x8x1xf32> to vector<2x1x1xf32>
    %104 = vector.shape_cast %103 : vector<2x1x1xf32> to vector<2x1xf32>
    %105 = tpu.concatenate %90, %92, %94, %96, %98, %100, %102, %104 in 1 : vector<2x1xf32>, vector<2x1xf32>, vector<2x1xf32>, vector<2x1xf32>, vector<2x1xf32>, vector<2x1xf32>, vector<2x1xf32>, vector<2x1xf32> -> vector<2x8xf32>
    %106 = vector.shape_cast %105 : vector<2x8xf32> to vector<2x1x8xf32>
    %107 = vector.broadcast %87 : vector<2x8x1xf32> to vector<2x8x8xf32>
    %108 = vector.broadcast %106 : vector<2x1x8xf32> to vector<2x8x8xf32>
    %109 = arith.addf %107, %108 : vector<2x8x8xf32>
    %cst_32 = arith.constant 0.000000e+00 : f32
    %110 = vector.broadcast %cst_32 : f32 to vector<2x8x8xf32>
    %111 = arith.cmpf ogt, %109, %110 : vector<2x8x8xf32>
    %cst_33 = arith.constant 2.000000e-01 : f32
    %112 = vector.broadcast %cst_33 : f32 to vector<2x8x8xf32>
    %113 = arith.mulf %112, %109 : vector<2x8x8xf32>
    %114 = arith.select %111, %109, %113 : vector<2x8x8xi1>, vector<2x8x8xf32>
    %cst_34 = arith.constant 0.000000e+00 : f32
    %115 = vector.broadcast %cst_34 : f32 to vector<2x8x8xf32>
    %116 = arith.cmpf ogt, %16, %115 : vector<2x8x8xf32>
    %cst_35 = arith.constant -9.000000e+15 : f32
    %117 = vector.broadcast %cst_35 : f32 to vector<2x8x8xf32>
    %118 = arith.select %116, %114, %117 : vector<2x8x8xi1>, vector<2x8x8xf32>
    %cst_36 = arith.constant dense<0xFF800000> : vector<2x8xf32>
    %119 = vector.multi_reduction <maximumf>, %118, %cst_36 [2] : vector<2x8x8xf32> to vector<2x8xf32>
    %120 = vector.shape_cast %119 : vector<2x8xf32> to vector<2x8x1xf32>
    %121 = vector.broadcast %120 : vector<2x8x1xf32> to vector<2x8x8xf32>
    %122 = arith.subf %118, %121 : vector<2x8x8xf32>
    %123 = math.exp %122 : vector<2x8x8xf32>
    %cst_37 = arith.constant dense<0.000000e+00> : vector<2x8xf32>
    %124 = vector.multi_reduction <add>, %123, %cst_37 [2] : vector<2x8x8xf32> to vector<2x8xf32>
    %125 = vector.shape_cast %124 : vector<2x8xf32> to vector<2x8x1xf32>
    %126 = vector.broadcast %125 : vector<2x8x1xf32> to vector<2x8x8xf32>
    %127 = arith.divf %123, %126 : vector<2x8x8xf32>
    "tpu.trace_start"() <{level = 10 : i32, message = "bij,bje->bie"}> : () -> ()
    %cst_38 = arith.constant dense<0.000000e+00> : vector<2x8x32xf32>
    %128 = tpu.matmul %127, %86, %cst_38 {dimension_numbers = #tpu.dot_dimension_numbers<[2], [1], [1], [2], [0, 0, 0, 1, 1, 2], [0], [0]>} : vector<2x8x8xf32>, vector<2x8x32xf32>, vector<2x8x32xf32> -> vector<2x8x32xf32>
    %cst_39 = arith.constant 0.000000e+00 : f32
    "tpu.trace_stop"() : () -> ()
    %129 = vector.broadcast %cst_39 : f32 to vector<2x8x32xf32>
    %130 = arith.cmpf ogt, %128, %129 : vector<2x8x32xf32>
    %cst_40 = arith.constant 0.000000e+00 : f32
    %131 = vector.broadcast %cst_40 : f32 to vector<2x8x32xf32>
    %132 = arith.minimumf %128, %131 : vector<2x8x32xf32>
    %133 = math.exp %132 : vector<2x8x32xf32>
    %cst_41 = arith.constant 1.000000e+00 : f32
    %134 = vector.broadcast %cst_41 : f32 to vector<2x8x32xf32>
    %135 = arith.subf %133, %134 : vector<2x8x32xf32>
    %cst_42 = arith.constant 0.166666672 : f32
    %136 = vector.broadcast %cst_42 : f32 to vector<2x8x32xf32>
    %137 = arith.mulf %132, %136 : vector<2x8x32xf32>
    %cst_43 = arith.constant 5.000000e-01 : f32
    %138 = vector.broadcast %cst_43 : f32 to vector<2x8x32xf32>
    %139 = arith.addf %138, %137 : vector<2x8x32xf32>
    %140 = arith.mulf %132, %139 : vector<2x8x32xf32>
    %cst_44 = arith.constant 1.000000e+00 : f32
    %141 = vector.broadcast %cst_44 : f32 to vector<2x8x32xf32>
    %142 = arith.addf %141, %140 : vector<2x8x32xf32>
    %143 = arith.mulf %132, %142 : vector<2x8x32xf32>
    %cst_45 = arith.constant -0.00999999977 : f32
    %144 = vector.broadcast %cst_45 : f32 to vector<2x8x32xf32>
    %145 = arith.cmpf ogt, %132, %144 : vector<2x8x32xf32>
    %146 = arith.select %145, %143, %135 : vector<2x8x32xi1>, vector<2x8x32xf32>
    %147 = arith.select %130, %128, %146 : vector<2x8x32xi1>, vector<2x8x32xf32>
    %c144 = arith.constant 144 : index
    %c0_46 = arith.constant 0 : index
    %148 = vector.load %arg3[%c144, %c0_46] : memref<232x64xf32, #tpu.memory_space<vmem>>, vector<32x32xf32>
    %149 = vector.shape_cast %147 : vector<2x8x32xf32> to vector<16x32xf32>
    %cst_47 = arith.constant dense<0.000000e+00> : vector<16x32xf32>
    %150 = tpu.matmul %149, %148, %cst_47 {dimension_numbers = #tpu.dot_dimension_numbers<[1], [0], [0], [1], [0, 0, 1, 1], [], []>} : vector<16x32xf32>, vector<32x32xf32>, vector<16x32xf32> -> vector<16x32xf32>
    %151 = arith.addf %84, %150 : vector<16x32xf32>
    %152 = vector.broadcast %5 : vector<1x32xf32> to vector<16x32xf32>
    %153 = arith.addf %151, %152 : vector<16x32xf32>
    %cst_48 = arith.constant 0.000000e+00 : f32
    %154 = vector.broadcast %cst_48 : f32 to vector<16x32xf32>
    %155 = arith.maximumf %153, %154 : vector<16x32xf32>
    %cst_49 = arith.constant dense<0.000000e+00> : vector<16x8xf32>
    %156 = tpu.matmul %155, %3, %cst_49 {dimension_numbers = #tpu.dot_dimension_numbers<[1], [0], [0], [1], [0, 0, 1, 1], [], []>} : vector<16x32xf32>, vector<32x8xf32>, vector<16x8xf32> -> vector<16x8xf32>
    %157 = vector.broadcast %6 : vector<1x8xf32> to vector<16x8xf32>
    %158 = arith.addf %156, %157 : vector<16x8xf32>
    %159 = vector.shape_cast %155 : vector<16x32xf32> to vector<2x8x32xf32>
    %160 = vector.extract_strided_slice %159 {offsets = [0, 0, 0], sizes = [2, 1, 32], strides = [1, 1, 1]} : vector<2x8x32xf32> to vector<2x1x32xf32>
    %161 = vector.shape_cast %160 : vector<2x1x32xf32> to vector<2x32xf32>
    %162 = vector.extract_strided_slice %159 {offsets = [0, 1, 0], sizes = [2, 1, 32], strides = [1, 1, 1]} : vector<2x8x32xf32> to vector<2x1x32xf32>
    %163 = vector.shape_cast %162 : vector<2x1x32xf32> to vector<2x32xf32>
    %164 = vector.extract_strided_slice %159 {offsets = [0, 2, 0], sizes = [2, 1, 32], strides = [1, 1, 1]} : vector<2x8x32xf32> to vector<2x1x32xf32>
    %165 = vector.shape_cast %164 : vector<2x1x32xf32> to vector<2x32xf32>
    %166 = vector.extract_strided_slice %159 {offsets = [0, 3, 0], sizes = [2, 1, 32], strides = [1, 1, 1]} : vector<2x8x32xf32> to vector<2x1x32xf32>
    %167 = vector.shape_cast %166 : vector<2x1x32xf32> to vector<2x32xf32>
    %168 = vector.extract_strided_slice %159 {offsets = [0, 4, 0], sizes = [2, 1, 32], strides = [1, 1, 1]} : vector<2x8x32xf32> to vector<2x1x32xf32>
    %169 = vector.shape_cast %168 : vector<2x1x32xf32> to vector<2x32xf32>
    %170 = vector.extract_strided_slice %159 {offsets = [0, 5, 0], sizes = [2, 1, 32], strides = [1, 1, 1]} : vector<2x8x32xf32> to vector<2x1x32xf32>
    %171 = vector.shape_cast %170 : vector<2x1x32xf32> to vector<2x32xf32>
    %172 = vector.extract_strided_slice %159 {offsets = [0, 6, 0], sizes = [2, 1, 32], strides = [1, 1, 1]} : vector<2x8x32xf32> to vector<2x1x32xf32>
    %173 = vector.shape_cast %172 : vector<2x1x32xf32> to vector<2x32xf32>
    %174 = vector.extract_strided_slice %159 {offsets = [0, 7, 0], sizes = [2, 1, 32], strides = [1, 1, 1]} : vector<2x8x32xf32> to vector<2x1x32xf32>
    %175 = vector.shape_cast %174 : vector<2x1x32xf32> to vector<2x32xf32>
    %176 = tpu.concatenate %161, %163, %165, %167, %169, %171, %173, %175 in 1 : vector<2x32xf32>, vector<2x32xf32>, vector<2x32xf32>, vector<2x32xf32>, vector<2x32xf32>, vector<2x32xf32>, vector<2x32xf32>, vector<2x32xf32> -> vector<2x256xf32>
    %c0_50 = arith.constant 0 : index
    %c0_51 = arith.constant 0 : index
    %177 = vector.load %arg5[%c0_50, %c0_51] : memref<2x256xf32, #tpu.memory_space<vmem>>, vector<2x256xf32>
    tpu.vector_store %arg5[%c0_50, %c0_51], %176 {strides = array<i32>} : memref<2x256xf32, #tpu.memory_space<vmem>>, vector<2x256xf32>,
    %178 = vector.shape_cast %158 : vector<16x8xf32> to vector<2x8x8xf32>
    %179 = vector.extract_strided_slice %178 {offsets = [0, 0, 0], sizes = [2, 1, 8], strides = [1, 1, 1]} : vector<2x8x8xf32> to vector<2x1x8xf32>
    %180 = vector.shape_cast %179 : vector<2x1x8xf32> to vector<2x8xf32>
    %181 = vector.extract_strided_slice %178 {offsets = [0, 1, 0], sizes = [2, 1, 8], strides = [1, 1, 1]} : vector<2x8x8xf32> to vector<2x1x8xf32>
    %182 = vector.shape_cast %181 : vector<2x1x8xf32> to vector<2x8xf32>
    %183 = vector.extract_strided_slice %178 {offsets = [0, 2, 0], sizes = [2, 1, 8], strides = [1, 1, 1]} : vector<2x8x8xf32> to vector<2x1x8xf32>
    %184 = vector.shape_cast %183 : vector<2x1x8xf32> to vector<2x8xf32>
    %185 = vector.extract_strided_slice %178 {offsets = [0, 3, 0], sizes = [2, 1, 8], strides = [1, 1, 1]} : vector<2x8x8xf32> to vector<2x1x8xf32>
    %186 = vector.shape_cast %185 : vector<2x1x8xf32> to vector<2x8xf32>
    %187 = vector.extract_strided_slice %178 {offsets = [0, 4, 0], sizes = [2, 1, 8], strides = [1, 1, 1]} : vector<2x8x8xf32> to vector<2x1x8xf32>
    %188 = vector.shape_cast %187 : vector<2x1x8xf32> to vector<2x8xf32>
    %189 = vector.extract_strided_slice %178 {offsets = [0, 5, 0], sizes = [2, 1, 8], strides = [1, 1, 1]} : vector<2x8x8xf32> to vector<2x1x8xf32>
    %190 = vector.shape_cast %189 : vector<2x1x8xf32> to vector<2x8xf32>
    %191 = vector.extract_strided_slice %178 {offsets = [0, 6, 0], sizes = [2, 1, 8], strides = [1, 1, 1]} : vector<2x8x8xf32> to vector<2x1x8xf32>
    %192 = vector.shape_cast %191 : vector<2x1x8xf32> to vector<2x8xf32>
    %193 = vector.extract_strided_slice %178 {offsets = [0, 7, 0], sizes = [2, 1, 8], strides = [1, 1, 1]} : vector<2x8x8xf32> to vector<2x1x8xf32>
    %194 = vector.shape_cast %193 : vector<2x1x8xf32> to vector<2x8xf32>
    %195 = tpu.concatenate %180, %182, %184, %186, %188, %190, %192, %194 in 1 : vector<2x8xf32>, vector<2x8xf32>, vector<2x8xf32>, vector<2x8xf32>, vector<2x8xf32>, vector<2x8xf32>, vector<2x8xf32>, vector<2x8xf32> -> vector<2x64xf32>
    %c0_52 = arith.constant 0 : index
    %c0_53 = arith.constant 0 : index
    %196 = vector.load %arg4[%c0_52, %c0_53] : memref<2x64xf32, #tpu.memory_space<vmem>>, vector<2x64xf32>
    tpu.vector_store %arg4[%c0_52, %c0_53], %195 {strides = array<i32>} : memref<2x64xf32, #tpu.memory_space<vmem>>, vector<2x64xf32>,
    return
  }
  func.func @transform_0(%arg0: i32) -> (i32, i32) {
    %c0_i32 = arith.constant 0 : i32
    %c0_i32_0 = arith.constant 0 : i32
    return %arg0, %c0_i32 : i32, i32
  }
  func.func @transform_1(%arg0: i32) -> (i32, i32, i32) {
    %c0_i32 = arith.constant 0 : i32
    %c0_i32_0 = arith.constant 0 : i32
    %c0_i32_1 = arith.constant 0 : i32
    return %arg0, %c0_i32, %c0_i32_0 : i32, i32, i32
  }
  func.func @transform_2(%arg0: i32) -> (i32, i32) {
    %c0_i32 = arith.constant 0 : i32
    %c0_i32_0 = arith.constant 0 : i32
    %c0_i32_1 = arith.constant 0 : i32
    return %c0_i32, %c0_i32_0 : i32, i32
  }
  func.func @transform_3(%arg0: i32) -> (i32, i32) {
    %c0_i32 = arith.constant 0 : i32
    %c0_i32_0 = arith.constant 0 : i32
    return %arg0, %c0_i32 : i32, i32
  }
  func.func @transform_4(%arg0: i32) -> (i32, i32) {
    %c0_i32 = arith.constant 0 : i32
    %c0_i32_0 = arith.constant 0 : i32
    return %arg0, %c0_i32 : i32, i32
  }
}

</mosaic_0001>

<llo_original>
// kernel: tpu_custom_call.1
$region0: #{tpu_custom_call.1}
  #allocation0 [shape = 'u32[]', space=smem, size = 0x4, offset = 0x4, fixed_abs, tag = 'smem constant byte address 0x4 - core index']
  #allocation1 [shape = 'u32[144,128]{1,0:T(1,128)}', space=vmem, size = 0x12000, scoped, tag = 'internal scratch']
  %s0 = inlined_call_operand.vmem [shape: f32[16,16], index: 0, kind: input, shape index: {}]
  %s1 = inlined_call_operand.vmem [shape: f32[2,8,8], index: 1, kind: input, shape index: {}]
  %s2 = inlined_call_operand.vmem [shape: f32[232,64], index: 2, kind: input, shape index: {}]
  %s3 = inlined_call_operand.hbm [shape: f32[2,64], index: 3, kind: output, shape index: {0}]
  %s4 = inlined_call_operand.hbm [shape: f32[2,256], index: 4, kind: output, shape index: {1}]
  %5 = xla_tuple %s3, %s4
  %s6 = sld [smem:[#allocation0]]
  $region30: #{tpu_custom_call.1} parent=0
    _
  %s8 = ssub.s32 1, %s6
  %s9 = scalar_select 0, %s8, %s6
  $region1: #{tpu_custom_call.1} parent=0
    #allocation2 [shape = 'u8[1024]{0}', space=vmem, size = 0x400, scoped, tag = 'output window, operand 0, single buffered']
    #allocation3 [shape = 's32[1]{0}', space=sflag, size = 0x4, scoped, tag = 'scoped memory for tpu_custom_call.1']
    #allocation4 [shape = 'u8[2048]{0}', space=vmem, size = 0x800, scoped, tag = 'output window, operand 1, single buffered']
    #allocation5 [shape = 's32[1]{0}', space=sflag, size = 0x4, scoped, tag = 'scoped memory for tpu_custom_call.1']
    %10 = vsyncpa [#allocation3], 0
    %11 = vsyncpa [#allocation5], 0
    // Predicated region
    $region2: #{tpu_custom_call.1} parent=1 // pred_check
      _
    $region3: #{tpu_custom_call.1} parent=1 // pred_check_branch
      %13 = sbr.rel (0) target = $region5
    $region4: #{tpu_custom_call.1} parent=1 // pred_region
      _
    $region5: #{tpu_custom_call.1} parent=1 // pred_fallthru
      _
    // Predicated region
    $region6: #{tpu_custom_call.1} parent=1 // pred_check
      _
    $region7: #{tpu_custom_call.1} parent=1 // pred_check_branch
      %15 = sbr.rel (0) target = $region9
    $region8: #{tpu_custom_call.1} parent=1 // pred_region
      _
    $region9: #{tpu_custom_call.1} parent=1 // pred_fallthru
      _
    // Predicated region
    $region10: #{tpu_custom_call.1} parent=1 // pred_check
      _
    $region11: #{tpu_custom_call.1} parent=1 // pred_check_branch
      %17 = sbr.rel (0) target = $region13
    $region12: #{tpu_custom_call.1} parent=1 // pred_region
      _
    $region13: #{tpu_custom_call.1} parent=1 // pred_fallthru
      _
    %v18 = vld [vmem:[%s2] sm:$0xff]
    %v19 = vld [vmem:[%s2 + $0x8] sm:$0xff]
    %v20 = vld [vmem:[%s2 + $0x10] sm:$0xff]
    %v21 = vld [vmem:[%s2 + $0x18] sm:$0xff]
    %v22 = vld [vmem:[%s2 + $0x20] sm:$0xff]
    %v23 = vld [vmem:[%s2 + $0x28] sm:$0xff]
    %v24 = vld [vmem:[%s2 + $0x30] sm:$0xff]
    %v25 = vld [vmem:[%s2 + $0x38] sm:$0xff]
    %v26 = vld [vmem:[%s2 + $0x40] sm:$0xff]
    %v27 = vld [vmem:[%s2 + $0x48] sm:$0xff]
    %v28 = vld [vmem:[%s2 + $0x50] sm:$0xff]
    %v29 = vld [vmem:[%s2 + $0x58] sm:$0xff]
    %v30 = vld [vmem:[%s2 + $0x60] sm:$0xff]
    %v31 = vld [vmem:[%s2 + $0x68] sm:$0xff]
    %v32 = vld [vmem:[%s2 + $0xb0] sm:$0xff]
    %v33 = vld [vmem:[%s2 + $0xb8] sm:$0xff]
    %v34 = vld [vmem:[%s2 + $0xc0] sm:$0xff]
    %v35 = vld [vmem:[%s2 + $0xc8] sm:$0xff]
    %v36 = vld [vmem:[%s2 + $0xd0] sm:$0x1]
    %v37 = vld [vmem:[%s2 + $0xd8] sm:$0x1]
    %v38 = vld [vmem:[%s2 + $0xe0] sm:$0x1]
    %v39 = vld [vmem:[%s0] sm:$0xff]
    %v40 = vld [vmem:[%s0 + $0x8] sm:$0xff]
    %v41 = vlaneseq
    %v42 = vshrl.u32 %v41, 7
    %v43 = vsub.s32 0, %v42
    %v44 = vrot.slane %v36, %v43
    %vm45 = vcmask 130048
    %v47 = vsel %vm45, %v39, 0
    %v50 = vsel %vm45, %v40, 0
    %52 = vmatprep.subr.mxu0 0.0
    %53 = vmatpush1.msra.mxu0 %v18
    %54 = vmatprep.subr.mxu0 0.0
    %55 = vmatpush1.msra.mxu0 %v19
    %56 = vmatprep.subr.mxu0 0.0
    %57 = vmatpush1.msra.mxu0 0.0
    %58 = vmatprep.subr.mxu0 0.0
    %59 = vmatpush1.msra.mxu0 0.0
    %60 = vmatprep.subr.mxu0 0.0
    %61 = vmatpush1.msra.mxu0 0.0
    %62 = vmatprep.subr.mxu0 0.0
    %63 = vmatpush1.msra.mxu0 0.0
    %64 = vmatprep.subr.mxu0 0.0
    %65 = vmatpush1.msra.mxu0 0.0
    %66 = vmatprep.subr.mxu0 0.0
    %67 = vmatpush1.msra.mxu0 0.0
    %68 = vmatprep.subr.mxu0 0.0
    %69 = vmatpush1.msra.mxu0 0.0
    %70 = vmatprep.subr.mxu0 0.0
    %71 = vmatpush1.msra.mxu0 0.0
    %72 = vmatprep.subr.mxu0 0.0
    %73 = vmatpush1.msra.mxu0 0.0
    %74 = vmatprep.subr.mxu0 0.0
    %75 = vmatpush1.msra.mxu0 0.0
    %76 = vmatprep.subr.mxu0 0.0
    %77 = vmatpush1.msra.mxu0 0.0
    %78 = vmatprep.subr.mxu0 0.0
    %79 = vmatpush1.msra.mxu0 0.0
    %80 = vmatprep.subr.mxu0 0.0
    %81 = vmatpush1.msra.mxu0 0.0
    %82 = vmatprep.subr.mxu0 0.0
    %83 = vmatpush1.msra.mxu0 0.0
    %84 = vmatprep.subr.mxu0 0.0
    %85 = vmatpush1.msra.mxu0 0.0
    %86 = vmatprep.subr.mxu0 0.0
    %87 = vmatpush1.msra.mxu0 0.0
    %88 = vmatprep.subr.mxu0 0.0
    %89 = vmatpush1.msra.mxu0 0.0
    %90 = vmatprep.subr.mxu0 0.0
    %91 = vmatpush1.msra.mxu0 0.0
    %92 = vmatprep.subr.mxu0 0.0
    %93 = vmatpush1.msra.mxu0 0.0
    %94 = vmatprep.subr.mxu0 0.0
    %95 = vmatpush1.msra.mxu0 0.0
    %96 = vmatprep.subr.mxu0 0.0
    %97 = vmatpush1.msra.mxu0 0.0
    %98 = vmatprep.subr.mxu0 0.0
    %99 = vmatpush1.msra.mxu0 0.0
    %100 = vmatprep.subr.mxu0 0.0
    %101 = vmatpush1.msra.mxu0 0.0
    %102 = vmatprep.subr.mxu0 0.0
    %103 = vmatpush1.msra.mxu0 0.0
    %104 = vmatprep.subr.mxu0 0.0
    %105 = vmatpush1.msra.mxu0 0.0
    %106 = vmatprep.subr.mxu0 0.0
    %107 = vmatpush1.msra.mxu0 0.0
    %108 = vmatprep.subr.mxu0 0.0
    %109 = vmatpush1.msra.mxu0 0.0
    %110 = vmatprep.subr.mxu0 0.0
    %111 = vmatpush1.msra.mxu0 0.0
    %112 = vmatprep.subr.mxu0 0.0
    %113 = vmatpush1.msra.mxu0 0.0
    %114 = vmatprep.subr.mxu0 0.0
    %115 = vmatpush1.msra.mxu0 0.0
    %116 = vmatprep.mubr.f32.mxu0 0.0
    %117 = vmatmul.mubr.f32.gmra.mrb[0].mxu0 %v47
    %v118 = vpop.f32.mrb[0].mxu0
    %v119 = vadd.f32 %v44, %v118
    %v120 = vpop.f32.mrb[0].mxu0
    %121 = vmatprep.mubr.f32.mxu0 0.0
    %122 = vmatmul.mubr.f32.gmra.mrb[0].mxu0 %v50
    %v123 = vpop.f32.mrb[0].mxu0
    %v124 = vadd.f32 %v44, %v123
    %v125 = vpop.f32.mrb[0].mxu0
    %126 = vdwg.mxu0
    %v127 = vmax.f32 %v119, 0.0
    %v128 = vmax.f32 %v124, 0.0
    %vm129 = vcmask 261120
    %v131 = vsel %vm129, %v127, 0
    %v134 = vsel %vm129, %v128, 0
    %136 = vmatprep.subr.mxu0 0.0
    %137 = vmatpush1.msra.mxu0 %v20
    %138 = vmatprep.subr.mxu0 0.0
    %139 = vmatpush1.msra.mxu0 %v21
    %140 = vmatprep.subr.mxu0 0.0
    %141 = vmatpush1.msra.mxu0 %v22
    %142 = vmatprep.subr.mxu0 0.0
    %143 = vmatpush1.msra.mxu0 %v23
    %144 = vmatprep.subr.mxu0 0.0
    %145 = vmatpush1.msra.mxu0 0.0
    %146 = vmatprep.subr.mxu0 0.0
    %147 = vmatpush1.msra.mxu0 0.0
    %148 = vmatprep.subr.mxu0 0.0
    %149 = vmatpush1.msra.mxu0 0.0
    %150 = vmatprep.subr.mxu0 0.0
    %151 = vmatpush1.msra.mxu0 0.0
    %152 = vmatprep.subr.mxu0 0.0
    %153 = vmatpush1.msra.mxu0 0.0
    %154 = vmatprep.subr.mxu0 0.0
    %155 = vmatpush1.msra.mxu0 0.0
    %156 = vmatprep.subr.mxu0 0.0
    %157 = vmatpush1.msra.mxu0 0.0
    %158 = vmatprep.subr.mxu0 0.0
    %159 = vmatpush1.msra.mxu0 0.0
    %160 = vmatprep.subr.mxu0 0.0
    %161 = vmatpush1.msra.mxu0 0.0
    %162 = vmatprep.subr.mxu0 0.0
    %163 = vmatpush1.msra.mxu0 0.0
    %164 = vmatprep.subr.mxu0 0.0
    %165 = vmatpush1.msra.mxu0 0.0
    %166 = vmatprep.subr.mxu0 0.0
    %167 = vmatpush1.msra.mxu0 0.0
    %168 = vmatprep.subr.mxu0 0.0
    %169 = vmatpush1.msra.mxu0 0.0
    %170 = vmatprep.subr.mxu0 0.0
    %171 = vmatpush1.msra.mxu0 0.0
    %172 = vmatprep.subr.mxu0 0.0
    %173 = vmatpush1.msra.mxu0 0.0
    %174 = vmatprep.subr.mxu0 0.0
    %175 = vmatpush1.msra.mxu0 0.0
    %176 = vmatprep.subr.mxu0 0.0
    %177 = vmatpush1.msra.mxu0 0.0
    %178 = vmatprep.subr.mxu0 0.0
    %179 = vmatpush1.msra.mxu0 0.0
    %180 = vmatprep.subr.mxu0 0.0
    %181 = vmatpush1.msra.mxu0 0.0
    %182 = vmatprep.subr.mxu0 0.0
    %183 = vmatpush1.msra.mxu0 0.0
    %184 = vmatprep.subr.mxu0 0.0
    %185 = vmatpush1.msra.mxu0 0.0
    %186 = vmatprep.subr.mxu0 0.0
    %187 = vmatpush1.msra.mxu0 0.0
    %188 = vmatprep.subr.mxu0 0.0
    %189 = vmatpush1.msra.mxu0 0.0
    %190 = vmatprep.subr.mxu0 0.0
    %191 = vmatpush1.msra.mxu0 0.0
    %192 = vmatprep.subr.mxu0 0.0
    %193 = vmatpush1.msra.mxu0 0.0
    %194 = vmatprep.subr.mxu0 0.0
    %195 = vmatpush1.msra.mxu0 0.0
    %196 = vmatprep.subr.mxu0 0.0
    %197 = vmatpush1.msra.mxu0 0.0
    %198 = vmatprep.subr.mxu0 0.0
    %199 = vmatpush1.msra.mxu0 0.0
    %200 = vmatprep.mubr.f32.mxu0 0.0
    %201 = vmatmul.mubr.f32.gmra.mrb[0].mxu0 %v131
    %v202 = vpop.f32.mrb[0].mxu0
    %v203 = vadd.f32 0.0, %v202
    %v204 = vpop.f32.mrb[0].mxu0
    %205 = vmatprep.mubr.f32.mxu0 0.0
    %206 = vmatmul.mubr.f32.gmra.mrb[0].mxu0 %v134
    %v207 = vpop.f32.mrb[0].mxu0
    %v208 = vadd.f32 0.0, %v207
    %v209 = vpop.f32.mrb[0].mxu0
    %210 = vdwg.mxu0
    %vm211 = vcmask 523264
    %v213 = vsel %vm211, %v203, 0
    %v216 = vsel %vm211, %v208, 0
    %218 = vmatprep.subr.mxu0 0.0
    %219 = vmatpush1.msra.mxu0 %v24
    %220 = vmatprep.subr.mxu0 0.0
    %221 = vmatpush1.msra.mxu0 %v25
    %222 = vmatprep.subr.mxu0 0.0
    %223 = vmatpush1.msra.mxu0 %v26
    %224 = vmatprep.subr.mxu0 0.0
    %225 = vmatpush1.msra.mxu0 %v27
    %226 = vmatprep.subr.mxu0 0.0
    %227 = vmatpush1.msra.mxu0 %v28
    %228 = vmatprep.subr.mxu0 0.0
    %229 = vmatpush1.msra.mxu0 %v29
    %230 = vmatprep.subr.mxu0 0.0
    %231 = vmatpush1.msra.mxu0 %v30
    %232 = vmatprep.subr.mxu0 0.0
    %233 = vmatpush1.msra.mxu0 %v31
    %234 = vmatprep.subr.mxu0 0.0
    %235 = vmatpush1.msra.mxu0 0.0
    %236 = vmatprep.subr.mxu0 0.0
    %237 = vmatpush1.msra.mxu0 0.0
    %238 = vmatprep.subr.mxu0 0.0
    %239 = vmatpush1.msra.mxu0 0.0
    %240 = vmatprep.subr.mxu0 0.0
    %241 = vmatpush1.msra.mxu0 0.0
    %242 = vmatprep.subr.mxu0 0.0
    %243 = vmatpush1.msra.mxu0 0.0
    %244 = vmatprep.subr.mxu0 0.0
    %245 = vmatpush1.msra.mxu0 0.0
    %246 = vmatprep.subr.mxu0 0.0
    %247 = vmatpush1.msra.mxu0 0.0
    %248 = vmatprep.subr.mxu0 0.0
    %249 = vmatpush1.msra.mxu0 0.0
    %250 = vmatprep.subr.mxu0 0.0
    %251 = vmatpush1.msra.mxu0 0.0
    %252 = vmatprep.subr.mxu0 0.0
    %253 = vmatpush1.msra.mxu0 0.0
    %254 = vmatprep.subr.mxu0 0.0
    %255 = vmatpush1.msra.mxu0 0.0
    %256 = vmatprep.subr.mxu0 0.0
    %257 = vmatpush1.msra.mxu0 0.0
    %258 = vmatprep.subr.mxu0 0.0
    %259 = vmatpush1.msra.mxu0 0.0
    %260 = vmatprep.subr.mxu0 0.0
    %261 = vmatpush1.msra.mxu0 0.0
    %262 = vmatprep.subr.mxu0 0.0
    %263 = vmatpush1.msra.mxu0 0.0
    %264 = vmatprep.subr.mxu0 0.0
    %265 = vmatpush1.msra.mxu0 0.0
    %266 = vmatprep.subr.mxu0 0.0
    %267 = vmatpush1.msra.mxu0 0.0
    %268 = vmatprep.subr.mxu0 0.0
    %269 = vmatpush1.msra.mxu0 0.0
    %270 = vmatprep.subr.mxu0 0.0
    %271 = vmatpush1.msra.mxu0 0.0
    %272 = vmatprep.subr.mxu0 0.0
    %273 = vmatpush1.msra.mxu0 0.0
    %274 = vmatprep.subr.mxu0 0.0
    %275 = vmatpush1.msra.mxu0 0.0
    %276 = vmatprep.subr.mxu0 0.0
    %277 = vmatpush1.msra.mxu0 0.0
    %278 = vmatprep.subr.mxu0 0.0
    %279 = vmatpush1.msra.mxu0 0.0
    %280 = vmatprep.subr.mxu0 0.0
    %281 = vmatpush1.msra.mxu0 0.0
    %282 = vmatprep.mubr.f32.mxu0 0.0
    %283 = vmatmul.mubr.f32.gmra.mrb[0].mxu0 %v213
    %v284 = vpop.f32.mrb[0].mxu0
    %v285 = vadd.f32 0.0, %v284
    %v286 = vpop.f32.mrb[0].mxu0
    %287 = vmatprep.mubr.f32.mxu0 0.0
    %288 = vmatmul.mubr.f32.gmra.mrb[0].mxu0 %v216
    %v289 = vpop.f32.mrb[0].mxu0
    %v290 = vadd.f32 0.0, %v289
    %v291 = vpop.f32.mrb[0].mxu0
    %292 = vdwg.mxu0
    %v293 = vld [vmem:[%s1] sm:$0xff]
    %v294 = vld [vmem:[%s1 + $0x8] sm:$0xff]
    %v297 = vrot.slane %v290, 7
    %vm298 = vcmask 1041409
    %v299 = vsel %vm298, %v297, %v285
    %300 = vrot.lane.b32.xlu0 %v299, 127
    %v301 = vpop.permute.xlu0 %300
    %v303 = vrot.slane %v285, 1
    %v304 = vsel %vm298, %v290, %v303
    %v306 = vrot.slane %v285, 2
    %v307 = vrot.slane %v290, 1
    %v308 = vsel %vm298, %v307, %v306
    %309 = vrot.lane.b32.xlu0 %v308, 1
    %v310 = vpop.permute.xlu0 %309
    %v312 = vrot.slane %v285, 3
    %v313 = vrot.slane %v290, 2
    %v314 = vsel %vm298, %v313, %v312
    %315 = vrot.lane.b32.xlu0 %v314, 2
    %v316 = vpop.permute.xlu0 %315
    %v318 = vrot.slane %v285, 4
    %v319 = vrot.slane %v290, 3
    %v320 = vsel %vm298, %v319, %v318
    %321 = vrot.lane.b32.xlu0 %v320, 3
    %v322 = vpop.permute.xlu0 %321
    %v324 = vrot.slane %v285, 5
    %v325 = vrot.slane %v290, 4
    %v326 = vsel %vm298, %v325, %v324
    %327 = vrot.lane.b32.xlu0 %v326, 4
    %v328 = vpop.permute.xlu0 %327
    %v330 = vrot.slane %v285, 6
    %v331 = vrot.slane %v290, 5
    %v332 = vsel %vm298, %v331, %v330
    %333 = vrot.lane.b32.xlu0 %v332, 5
    %v334 = vpop.permute.xlu0 %333
    %v336 = vrot.slane %v285, 7
    %v337 = vrot.slane %v290, 6
    %v338 = vsel %vm298, %v337, %v336
    %339 = vrot.lane.b32.xlu0 %v338, 6
    %v340 = vpop.permute.xlu0 %339
    %vm342 = vcmask 7168
    %v343 = vsel %vm342, %v301, %v304
    %vm344 = vcmask 15360
    %v345 = vsel %vm344, %v343, %v310
    %vm346 = vcmask 23552
    %v347 = vsel %vm346, %v345, %v316
    %vm348 = vcmask 31744
    %v349 = vsel %vm348, %v347, %v322
    %vm350 = vcmask 39936
    %v351 = vsel %vm350, %v349, %v328
    %vm352 = vcmask 48128
    %v353 = vsel %vm352, %v351, %v334
    %vm354 = vcmask 56320
    %v355 = vsel %vm354, %v353, %v340
    %v358 = vunpack.c.l.s4 1966171168
    %v359 = vunpack.c.0.s8 %v358
    %v360 = vlaneseq
    %v361 = vshrl.u32 %v360, 7
    %v362 = vsub.s32 %v359, %v361
    %v363 = vrot.slane %v355, %v362
    %v364 = vcombine.high %v363, %v363
    %v366 = vunpack.c.l.s4 1966171168
    %v367 = vunpack.c.0.s8 %v366
    %v368 = vlaneseq
    %v369 = vshrl.u32 %v368, 7
    %v370 = vsub.s32 %v367, %v369
    %v371 = vrot.slane %v363, %v370
    %v373 = vunpack.c.l.s4 1966171168
    %v374 = vunpack.c.0.s8 %v373
    %v375 = vlaneseq
    %v376 = vshrl.u32 %v375, 7
    %v377 = vsub.s32 %v374, %v376
    %v378 = vrot.slane %v364, %v377
    %379 = vset.pattern.permute.xlu0 0
    %380 = vperm.xlu0 %379, %v285
    %v381 = vpop.permute.xlu0 %380
    %383 = vset.pattern.permute.xlu0 0
    %384 = vperm.xlu0 %383, %v290
    %v385 = vpop.permute.xlu0 %384
    %v387 = vlaneseq
    %v388 = vshrl.u32 %v387, 7
    %v389 = vsub.s32 0, %v388
    %v390 = vrot.slane %v371, %v389
    %v391 = vlaneseq
    %v392 = vshrl.u32 %v391, 7
    %v393 = vsub.s32 0, %v392
    %v394 = vrot.slane %v378, %v393
    %v397 = vadd.f32 %v381, %v390
    %v398 = vadd.f32 %v385, %v394
    %vm399 = vcmp.gt.f32.partialorder %v397, 0.0
    %vm400 = vcmp.gt.f32.partialorder %v398, 0.0
    %v401 = vmul.f32 %v397, 0.2
    %v402 = vmul.f32 %v398, 0.2
    %v403 = vsel %vm399, %v397, %v401
    %v404 = vsel %vm400, %v398, %v402
    %vm405 = vcmp.gt.f32.partialorder %v293, 0.0
    %vm406 = vcmp.gt.f32.partialorder %v294, 0.0
    %v407 = vsel %vm405, %v403, -9e+15
    %v408 = vsel %vm406, %v404, -9e+15
    %vm409 = vcmask 64512
    %v410 = vsel %vm409, %v407, -inf
    %411 = vmax.xlane.f32.xlu0 %v410
    %v412 = vpop.xlane.xlu0 %411
    %v413 = vsel %vm409, %v408, -inf
    %414 = vmax.xlane.f32.xlu0 %v413
    %v415 = vpop.xlane.xlu0 %414
    %v416 = vsub.f32 %v407, %v412
    %v417 = vsub.f32 %v408, %v415
    %v418 = vmul.f32 %v416, 1.442695
    %v419 = vpow.pop %v418
    %v420 = vmul.f32 %v417, 1.442695
    %v421 = vpow.pop %v420
    %v422 = vsel %vm409, %v419, 0.0
    %423 = vadd.xlane.f32.xlu0 %v422
    %v424 = vpop.xlane.xlu0 %423
    %v425 = vsel %vm409, %v421, 0.0
    %426 = vadd.xlane.f32.xlu0 %v425
    %v427 = vpop.xlane.xlu0 %426
    %v428 = vrcp.pop %v424
    %v429 = vmul.f32 %v419, %v428
    %v430 = vrcp.pop %v427
    %v431 = vmul.f32 %v421, %v430
    %v433 = vsel %vm409, %v429, 0
    %435 = vmatprep.subr.mxu0 0.0
    %436 = vmatpush1.msra.mxu0 %v203
    %437 = vmatprep.subr.mxu0 0.0
    %438 = vmatpush1.msra.mxu0 0.0
    %439 = vmatprep.subr.mxu0 0.0
    %440 = vmatpush1.msra.mxu0 0.0
    %441 = vmatprep.subr.mxu0 0.0
    %442 = vmatpush1.msra.mxu0 0.0
    %443 = vmatprep.subr.mxu0 0.0
    %444 = vmatpush1.msra.mxu0 0.0
    %445 = vmatprep.subr.mxu0 0.0
    %446 = vmatpush1.msra.mxu0 0.0
    %447 = vmatprep.subr.mxu0 0.0
    %448 = vmatpush1.msra.mxu0 0.0
    %449 = vmatprep.subr.mxu0 0.0
    %450 = vmatpush1.msra.mxu0 0.0
    %451 = vmatprep.subr.mxu0 0.0
    %452 = vmatpush1.msra.mxu0 0.0
    %453 = vmatprep.subr.mxu0 0.0
    %454 = vmatpush1.msra.mxu0 0.0
    %455 = vmatprep.subr.mxu0 0.0
    %456 = vmatpush1.msra.mxu0 0.0
    %457 = vmatprep.subr.mxu0 0.0
    %458 = vmatpush1.msra.mxu0 0.0
    %459 = vmatprep.subr.mxu0 0.0
    %460 = vmatpush1.msra.mxu0 0.0
    %461 = vmatprep.subr.mxu0 0.0
    %462 = vmatpush1.msra.mxu0 0.0
    %463 = vmatprep.subr.mxu0 0.0
    %464 = vmatpush1.msra.mxu0 0.0
    %465 = vmatprep.subr.mxu0 0.0
    %466 = vmatpush1.msra.mxu0 0.0
    %467 = vmatprep.subr.mxu0 0.0
    %468 = vmatpush1.msra.mxu0 0.0
    %469 = vmatprep.subr.mxu0 0.0
    %470 = vmatpush1.msra.mxu0 0.0
    %471 = vmatprep.subr.mxu0 0.0
    %472 = vmatpush1.msra.mxu0 0.0
    %473 = vmatprep.subr.mxu0 0.0
    %474 = vmatpush1.msra.mxu0 0.0
    %475 = vmatprep.subr.mxu0 0.0
    %476 = vmatpush1.msra.mxu0 0.0
    %477 = vmatprep.subr.mxu0 0.0
    %478 = vmatpush1.msra.mxu0 0.0
    %479 = vmatprep.subr.mxu0 0.0
    %480 = vmatpush1.msra.mxu0 0.0
    %481 = vmatprep.subr.mxu0 0.0
    %482 = vmatpush1.msra.mxu0 0.0
    %483 = vmatprep.subr.mxu0 0.0
    %484 = vmatpush1.msra.mxu0 0.0
    %485 = vmatprep.subr.mxu0 0.0
    %486 = vmatpush1.msra.mxu0 0.0
    %487 = vmatprep.subr.mxu0 0.0
    %488 = vmatpush1.msra.mxu0 0.0
    %489 = vmatprep.subr.mxu0 0.0
    %490 = vmatpush1.msra.mxu0 0.0
    %491 = vmatprep.subr.mxu0 0.0
    %492 = vmatpush1.msra.mxu0 0.0
    %493 = vmatprep.subr.mxu0 0.0
    %494 = vmatpush1.msra.mxu0 0.0
    %495 = vmatprep.subr.mxu0 0.0
    %496 = vmatpush1.msra.mxu0 0.0
    %497 = vmatprep.subr.mxu0 0.0
    %498 = vmatpush1.msra.mxu0 0.0
    %499 = vmatprep.mubr.f32.mxu0 0.0
    %500 = vmatmul.mubr.f32.gmra.mrb[0].mxu0 %v433
    %v501 = vpop.f32.mrb[0].mxu0
    %v502 = vadd.f32 0.0, %v501
    %v503 = vpop.f32.mrb[0].mxu0
    %504 = vdwg.mxu0
    %v506 = vsel %vm409, %v431, 0
    %508 = vmatprep.subr.mxu0 0.0
    %509 = vmatpush1.msra.mxu0 %v208
    %510 = vmatprep.subr.mxu0 0.0
    %511 = vmatpush1.msra.mxu0 0.0
    %512 = vmatprep.subr.mxu0 0.0
    %513 = vmatpush1.msra.mxu0 0.0
    %514 = vmatprep.subr.mxu0 0.0
    %515 = vmatpush1.msra.mxu0 0.0
    %516 = vmatprep.subr.mxu0 0.0
    %517 = vmatpush1.msra.mxu0 0.0
    %518 = vmatprep.subr.mxu0 0.0
    %519 = vmatpush1.msra.mxu0 0.0
    %520 = vmatprep.subr.mxu0 0.0
    %521 = vmatpush1.msra.mxu0 0.0
    %522 = vmatprep.subr.mxu0 0.0
    %523 = vmatpush1.msra.mxu0 0.0
    %524 = vmatprep.subr.mxu0 0.0
    %525 = vmatpush1.msra.mxu0 0.0
    %526 = vmatprep.subr.mxu0 0.0
    %527 = vmatpush1.msra.mxu0 0.0
    %528 = vmatprep.subr.mxu0 0.0
    %529 = vmatpush1.msra.mxu0 0.0
    %530 = vmatprep.subr.mxu0 0.0
    %531 = vmatpush1.msra.mxu0 0.0
    %532 = vmatprep.subr.mxu0 0.0
    %533 = vmatpush1.msra.mxu0 0.0
    %534 = vmatprep.subr.mxu0 0.0
    %535 = vmatpush1.msra.mxu0 0.0
    %536 = vmatprep.subr.mxu0 0.0
    %537 = vmatpush1.msra.mxu0 0.0
    %538 = vmatprep.subr.mxu0 0.0
    %539 = vmatpush1.msra.mxu0 0.0
    %540 = vmatprep.subr.mxu0 0.0
    %541 = vmatpush1.msra.mxu0 0.0
    %542 = vmatprep.subr.mxu0 0.0
    %543 = vmatpush1.msra.mxu0 0.0
    %544 = vmatprep.subr.mxu0 0.0
    %545 = vmatpush1.msra.mxu0 0.0
    %546 = vmatprep.subr.mxu0 0.0
    %547 = vmatpush1.msra.mxu0 0.0
    %548 = vmatprep.subr.mxu0 0.0
    %549 = vmatpush1.msra.mxu0 0.0
    %550 = vmatprep.subr.mxu0 0.0
    %551 = vmatpush1.msra.mxu0 0.0
    %552 = vmatprep.subr.mxu0 0.0
    %553 = vmatpush1.msra.mxu0 0.0
    %554 = vmatprep.subr.mxu0 0.0
    %555 = vmatpush1.msra.mxu0 0.0
    %556 = vmatprep.subr.mxu0 0.0
    %557 = vmatpush1.msra.mxu0 0.0
    %558 = vmatprep.subr.mxu0 0.0
    %559 = vmatpush1.msra.mxu0 0.0
    %560 = vmatprep.subr.mxu0 0.0
    %561 = vmatpush1.msra.mxu0 0.0
    %562 = vmatprep.subr.mxu0 0.0
    %563 = vmatpush1.msra.mxu0 0.0
    %564 = vmatprep.subr.mxu0 0.0
    %565 = vmatpush1.msra.mxu0 0.0
    %566 = vmatprep.subr.mxu0 0.0
    %567 = vmatpush1.msra.mxu0 0.0
    %568 = vmatprep.subr.mxu0 0.0
    %569 = vmatpush1.msra.mxu0 0.0
    %570 = vmatprep.subr.mxu0 0.0
    %571 = vmatpush1.msra.mxu0 0.0
    %572 = vmatprep.mubr.f32.mxu0 0.0
    %573 = vmatmul.mubr.f32.gmra.mrb[0].mxu0 %v506
    %v574 = vpop.f32.mrb[0].mxu0
    %v575 = vadd.f32 0.0, %v574
    %v576 = vpop.f32.mrb[0].mxu0
    %577 = vdwg.mxu0
    %vm578 = vcmp.gt.f32.partialorder %v502, 0.0
    %vm579 = vcmp.gt.f32.partialorder %v575, 0.0
    %v580 = vmin.f32 %v502, 0.0
    %v581 = vmin.f32 %v575, 0.0
    %v582 = vmul.f32 %v580, 1.442695
    %v583 = vpow.pop %v582
    %v584 = vmul.f32 %v581, 1.442695
    %v585 = vpow.pop %v584
    %v586 = vsub.f32 %v583, 1.0
    %v587 = vsub.f32 %v585, 1.0
    %v588 = vmul.f32 %v580, 0.16666667
    %v589 = vmul.f32 %v581, 0.16666667
    %v590 = vadd.f32 %v588, 0.5
    %v591 = vadd.f32 %v589, 0.5
    %v592 = vmul.f32 %v580, %v590
    %v593 = vmul.f32 %v581, %v591
    %v594 = vadd.f32 %v592, 1.0
    %v595 = vadd.f32 %v593, 1.0
    %v596 = vmul.f32 %v580, %v594
    %v597 = vmul.f32 %v581, %v595
    %vm598 = vcmp.gt.f32.partialorder %v580, -0.01
    %vm599 = vcmp.gt.f32.partialorder %v581, -0.01
    %v600 = vsel %vm598, %v596, %v586
    %v601 = vsel %vm599, %v597, %v587
    %v602 = vsel %vm578, %v502, %v600
    %v603 = vsel %vm579, %v575, %v601
    %v604 = vld [vmem:[%s2 + $0x70] sm:$0xff]
    %v605 = vld [vmem:[%s2 + $0x78] sm:$0xff]
    %v606 = vld [vmem:[%s2 + $0x80] sm:$0xff]
    %v607 = vld [vmem:[%s2 + $0x88] sm:$0xff]
    %608 = vrot.lane.b32.xlu0 %v299, 125
    %v609 = vpop.permute.xlu0 %608
    %611 = vrot.lane.b32.xlu0 %v304, 126
    %v612 = vpop.permute.xlu0 %611
    %614 = vrot.lane.b32.xlu0 %v308, 127
    %v615 = vpop.permute.xlu0 %614
    %618 = vrot.lane.b32.xlu0 %v320, 1
    %v619 = vpop.permute.xlu0 %618
    %621 = vrot.lane.b32.xlu0 %v326, 2
    %v622 = vpop.permute.xlu0 %621
    %624 = vrot.lane.b32.xlu0 %v332, 3
    %v625 = vpop.permute.xlu0 %624
    %627 = vrot.lane.b32.xlu0 %v338, 4
    %v628 = vpop.permute.xlu0 %627
    %v630 = vsel %vm342, %v609, %v612
    %v631 = vsel %vm344, %v630, %v615
    %v632 = vsel %vm346, %v631, %v314
    %v633 = vsel %vm348, %v632, %v619
    %v634 = vsel %vm350, %v633, %v622
    %v635 = vsel %vm352, %v634, %v625
    %v636 = vsel %vm354, %v635, %v628
    %v639 = vunpack.c.l.s4 1966171168
    %v640 = vunpack.c.0.s8 %v639
    %v641 = vlaneseq
    %v642 = vshrl.u32 %v641, 7
    %v643 = vsub.s32 %v640, %v642
    %v644 = vrot.slane %v636, %v643
    %v645 = vcombine.high %v644, %v644
    %v647 = vunpack.c.l.s4 1966171168
    %v648 = vunpack.c.0.s8 %v647
    %v649 = vlaneseq
    %v650 = vshrl.u32 %v649, 7
    %v651 = vsub.s32 %v648, %v650
    %v652 = vrot.slane %v644, %v651
    %v654 = vunpack.c.l.s4 1966171168
    %v655 = vunpack.c.0.s8 %v654
    %v656 = vlaneseq
    %v657 = vshrl.u32 %v656, 7
    %v658 = vsub.s32 %v655, %v657
    %v659 = vrot.slane %v645, %v658
    %660 = vset.pattern.permute.xlu0 2
    %661 = vperm.xlu0 %660, %v285
    %v662 = vpop.permute.xlu0 %661
    %664 = vset.pattern.permute.xlu0 2
    %665 = vperm.xlu0 %664, %v290
    %v666 = vpop.permute.xlu0 %665
    %v668 = vlaneseq
    %v669 = vshrl.u32 %v668, 7
    %v670 = vsub.s32 0, %v669
    %v671 = vrot.slane %v652, %v670
    %v672 = vlaneseq
    %v673 = vshrl.u32 %v672, 7
    %v674 = vsub.s32 0, %v673
    %v675 = vrot.slane %v659, %v674
    %v678 = vadd.f32 %v662, %v671
    %v679 = vadd.f32 %v666, %v675
    %vm680 = vcmp.gt.f32.partialorder %v678, 0.0
    %vm681 = vcmp.gt.f32.partialorder %v679, 0.0
    %v682 = vmul.f32 %v678, 0.2
    %v683 = vmul.f32 %v679, 0.2
    %v684 = vsel %vm680, %v678, %v682
    %v685 = vsel %vm681, %v679, %v683
    %v686 = vsel %vm405, %v684, -9e+15
    %v687 = vsel %vm406, %v685, -9e+15
    %v688 = vsel %vm409, %v686, -inf
    %689 = vmax.xlane.f32.xlu0 %v688
    %v690 = vpop.xlane.xlu0 %689
    %v691 = vsel %vm409, %v687, -inf
    %692 = vmax.xlane.f32.xlu0 %v691
    %v693 = vpop.xlane.xlu0 %692
    %v694 = vsub.f32 %v686, %v690
    %v695 = vsub.f32 %v687, %v693
    %v696 = vmul.f32 %v694, 1.442695
    %v697 = vpow.pop %v696
    %v698 = vmul.f32 %v695, 1.442695
    %v699 = vpow.pop %v698
    %v700 = vsel %vm409, %v697, 0.0
    %701 = vadd.xlane.f32.xlu0 %v700
    %v702 = vpop.xlane.xlu0 %701
    %v703 = vsel %vm409, %v699, 0.0
    %704 = vadd.xlane.f32.xlu0 %v703
    %v705 = vpop.xlane.xlu0 %704
    %v706 = vrcp.pop %v702
    %v707 = vmul.f32 %v697, %v706
    %v708 = vrcp.pop %v705
    %v709 = vmul.f32 %v699, %v708
    %710 = vrot.lane.b32.xlu0 %v203, 96
    %v711 = vpop.permute.xlu0 %710
    %v714 = vsel %vm409, %v707, 0
    %716 = vmatprep.subr.mxu0 0.0
    %717 = vmatpush1.msra.mxu0 %v711
    %718 = vmatprep.subr.mxu0 0.0
    %719 = vmatpush1.msra.mxu0 0.0
    %720 = vmatprep.subr.mxu0 0.0
    %721 = vmatpush1.msra.mxu0 0.0
    %722 = vmatprep.subr.mxu0 0.0
    %723 = vmatpush1.msra.mxu0 0.0
    %724 = vmatprep.subr.mxu0 0.0
    %725 = vmatpush1.msra.mxu0 0.0
    %726 = vmatprep.subr.mxu0 0.0
    %727 = vmatpush1.msra.mxu0 0.0
    %728 = vmatprep.subr.mxu0 0.0
    %729 = vmatpush1.msra.mxu0 0.0
    %730 = vmatprep.subr.mxu0 0.0
    %731 = vmatpush1.msra.mxu0 0.0
    %732 = vmatprep.subr.mxu0 0.0
    %733 = vmatpush1.msra.mxu0 0.0
    %734 = vmatprep.subr.mxu0 0.0
    %735 = vmatpush1.msra.mxu0 0.0
    %736 = vmatprep.subr.mxu0 0.0
    %737 = vmatpush1.msra.mxu0 0.0
    %738 = vmatprep.subr.mxu0 0.0
    %739 = vmatpush1.msra.mxu0 0.0
    %740 = vmatprep.subr.mxu0 0.0
    %741 = vmatpush1.msra.mxu0 0.0
    %742 = vmatprep.subr.mxu0 0.0
    %743 = vmatpush1.msra.mxu0 0.0
    %744 = vmatprep.subr.mxu0 0.0
    %745 = vmatpush1.msra.mxu0 0.0
    %746 = vmatprep.subr.mxu0 0.0
    %747 = vmatpush1.msra.mxu0 0.0
    %748 = vmatprep.subr.mxu0 0.0
    %749 = vmatpush1.msra.mxu0 0.0
    %750 = vmatprep.subr.mxu0 0.0
    %751 = vmatpush1.msra.mxu0 0.0
    %752 = vmatprep.subr.mxu0 0.0
    %753 = vmatpush1.msra.mxu0 0.0
    %754 = vmatprep.subr.mxu0 0.0
    %755 = vmatpush1.msra.mxu0 0.0
    %756 = vmatprep.subr.mxu0 0.0
    %757 = vmatpush1.msra.mxu0 0.0
    %758 = vmatprep.subr.mxu0 0.0
    %759 = vmatpush1.msra.mxu0 0.0
    %760 = vmatprep.subr.mxu0 0.0
    %761 = vmatpush1.msra.mxu0 0.0
    %762 = vmatprep.subr.mxu0 0.0
    %763 = vmatpush1.msra.mxu0 0.0
    %764 = vmatprep.subr.mxu0 0.0
    %765 = vmatpush1.msra.mxu0 0.0
    %766 = vmatprep.subr.mxu0 0.0
    %767 = vmatpush1.msra.mxu0 0.0
    %768 = vmatprep.subr.mxu0 0.0
    %769 = vmatpush1.msra.mxu0 0.0
    %770 = vmatprep.subr.mxu0 0.0
    %771 = vmatpush1.msra.mxu0 0.0
    %772 = vmatprep.subr.mxu0 0.0
    %773 = vmatpush1.msra.mxu0 0.0
    %774 = vmatprep.subr.mxu0 0.0
    %775 = vmatpush1.msra.mxu0 0.0
    %776 = vmatprep.subr.mxu0 0.0
    %777 = vmatpush1.msra.mxu0 0.0
    %778 = vmatprep.subr.mxu0 0.0
    %779 = vmatpush1.msra.mxu0 0.0
    %780 = vmatprep.mubr.f32.mxu0 0.0
    %781 = vmatmul.mubr.f32.gmra.mrb[0].mxu0 %v714
    %v782 = vpop.f32.mrb[0].mxu0
    %v783 = vadd.f32 0.0, %v782
    %v784 = vpop.f32.mrb[0].mxu0
    %785 = vdwg.mxu0
    %786 = vrot.lane.b32.xlu0 %v208, 96
    %v787 = vpop.permute.xlu0 %786
    %v790 = vsel %vm409, %v709, 0
    %792 = vmatprep.subr.mxu0 0.0
    %793 = vmatpush1.msra.mxu0 %v787
    %794 = vmatprep.subr.mxu0 0.0
    %795 = vmatpush1.msra.mxu0 0.0
    %796 = vmatprep.subr.mxu0 0.0
    %797 = vmatpush1.msra.mxu0 0.0
    %798 = vmatprep.subr.mxu0 0.0
    %799 = vmatpush1.msra.mxu0 0.0
    %800 = vmatprep.subr.mxu0 0.0
    %801 = vmatpush1.msra.mxu0 0.0
    %802 = vmatprep.subr.mxu0 0.0
    %803 = vmatpush1.msra.mxu0 0.0
    %804 = vmatprep.subr.mxu0 0.0
    %805 = vmatpush1.msra.mxu0 0.0
    %806 = vmatprep.subr.mxu0 0.0
    %807 = vmatpush1.msra.mxu0 0.0
    %808 = vmatprep.subr.mxu0 0.0
    %809 = vmatpush1.msra.mxu0 0.0
    %810 = vmatprep.subr.mxu0 0.0
    %811 = vmatpush1.msra.mxu0 0.0
    %812 = vmatprep.subr.mxu0 0.0
    %813 = vmatpush1.msra.mxu0 0.0
    %814 = vmatprep.subr.mxu0 0.0
    %815 = vmatpush1.msra.mxu0 0.0
    %816 = vmatprep.subr.mxu0 0.0
    %817 = vmatpush1.msra.mxu0 0.0
    %818 = vmatprep.subr.mxu0 0.0
    %819 = vmatpush1.msra.mxu0 0.0
    %820 = vmatprep.subr.mxu0 0.0
    %821 = vmatpush1.msra.mxu0 0.0
    %822 = vmatprep.subr.mxu0 0.0
    %823 = vmatpush1.msra.mxu0 0.0
    %824 = vmatprep.subr.mxu0 0.0
    %825 = vmatpush1.msra.mxu0 0.0
    %826 = vmatprep.subr.mxu0 0.0
    %827 = vmatpush1.msra.mxu0 0.0
    %828 = vmatprep.subr.mxu0 0.0
    %829 = vmatpush1.msra.mxu0 0.0
    %830 = vmatprep.subr.mxu0 0.0
    %831 = vmatpush1.msra.mxu0 0.0
    %832 = vmatprep.subr.mxu0 0.0
    %833 = vmatpush1.msra.mxu0 0.0
    %834 = vmatprep.subr.mxu0 0.0
    %835 = vmatpush1.msra.mxu0 0.0
    %836 = vmatprep.subr.mxu0 0.0
    %837 = vmatpush1.msra.mxu0 0.0
    %838 = vmatprep.subr.mxu0 0.0
    %839 = vmatpush1.msra.mxu0 0.0
    %840 = vmatprep.subr.mxu0 0.0
    %841 = vmatpush1.msra.mxu0 0.0
    %842 = vmatprep.subr.mxu0 0.0
    %843 = vmatpush1.msra.mxu0 0.0
    %844 = vmatprep.subr.mxu0 0.0
    %845 = vmatpush1.msra.mxu0 0.0
    %846 = vmatprep.subr.mxu0 0.0
    %847 = vmatpush1.msra.mxu0 0.0
    %848 = vmatprep.subr.mxu0 0.0
    %849 = vmatpush1.msra.mxu0 0.0
    %850 = vmatprep.subr.mxu0 0.0
    %851 = vmatpush1.msra.mxu0 0.0
    %852 = vmatprep.subr.mxu0 0.0
    %853 = vmatpush1.msra.mxu0 0.0
    %854 = vmatprep.subr.mxu0 0.0
    %855 = vmatpush1.msra.mxu0 0.0
    %856 = vmatprep.mubr.f32.mxu0 0.0
    %857 = vmatmul.mubr.f32.gmra.mrb[0].mxu0 %v790
    %v858 = vpop.f32.mrb[0].mxu0
    %v859 = vadd.f32 0.0, %v858
    %v860 = vpop.f32.mrb[0].mxu0
    %861 = vdwg.mxu0
    %vm862 = vcmp.gt.f32.partialorder %v783, 0.0
    %vm863 = vcmp.gt.f32.partialorder %v859, 0.0
    %v864 = vmin.f32 %v783, 0.0
    %v865 = vmin.f32 %v859, 0.0
    %v866 = vmul.f32 %v864, 1.442695
    %v867 = vpow.pop %v866
    %v868 = vmul.f32 %v865, 1.442695
    %v869 = vpow.pop %v868
    %v870 = vsub.f32 %v867, 1.0
    %v871 = vsub.f32 %v869, 1.0
    %v872 = vmul.f32 %v864, 0.16666667
    %v873 = vmul.f32 %v865, 0.16666667
    %v874 = vadd.f32 %v872, 0.5
    %v875 = vadd.f32 %v873, 0.5
    %v876 = vmul.f32 %v864, %v874
    %v877 = vmul.f32 %v865, %v875
    %v878 = vadd.f32 %v876, 1.0
    %v879 = vadd.f32 %v877, 1.0
    %v880 = vmul.f32 %v864, %v878
    %v881 = vmul.f32 %v865, %v879
    %vm882 = vcmp.gt.f32.partialorder %v864, -0.01
    %vm883 = vcmp.gt.f32.partialorder %v865, -0.01
    %v884 = vsel %vm882, %v880, %v870
    %v885 = vsel %vm883, %v881, %v871
    %v886 = vsel %vm862, %v783, %v884
    %v887 = vsel %vm863, %v859, %v885
    %v888 = vld [vmem:[%s2 + $0x90] sm:$0xff]
    %v889 = vld [vmem:[%s2 + $0x98] sm:$0xff]
    %v890 = vld [vmem:[%s2 + $0xa0] sm:$0xff]
    %v891 = vld [vmem:[%s2 + $0xa8] sm:$0xff]
    %v893 = vsel %vm129, %v886, 0
    %v896 = vsel %vm129, %v887, 0
    %898 = vmatprep.subr.mxu0 0.0
    %899 = vmatpush1.msra.mxu0 %v888
    %900 = vmatprep.subr.mxu0 0.0
    %901 = vmatpush1.msra.mxu0 %v889
    %902 = vmatprep.subr.mxu0 0.0
    %903 = vmatpush1.msra.mxu0 %v890
    %904 = vmatprep.subr.mxu0 0.0
    %905 = vmatpush1.msra.mxu0 %v891
    %906 = vmatprep.subr.mxu0 0.0
    %907 = vmatpush1.msra.mxu0 0.0
    %908 = vmatprep.subr.mxu0 0.0
    %909 = vmatpush1.msra.mxu0 0.0
    %910 = vmatprep.subr.mxu0 0.0
    %911 = vmatpush1.msra.mxu0 0.0
    %912 = vmatprep.subr.mxu0 0.0
    %913 = vmatpush1.msra.mxu0 0.0
    %914 = vmatprep.subr.mxu0 0.0
    %915 = vmatpush1.msra.mxu0 0.0
    %916 = vmatprep.subr.mxu0 0.0
    %917 = vmatpush1.msra.mxu0 0.0
    %918 = vmatprep.subr.mxu0 0.0
    %919 = vmatpush1.msra.mxu0 0.0
    %920 = vmatprep.subr.mxu0 0.0
    %921 = vmatpush1.msra.mxu0 0.0
    %922 = vmatprep.subr.mxu0 0.0
    %923 = vmatpush1.msra.mxu0 0.0
    %924 = vmatprep.subr.mxu0 0.0
    %925 = vmatpush1.msra.mxu0 0.0
    %926 = vmatprep.subr.mxu0 0.0
    %927 = vmatpush1.msra.mxu0 0.0
    %928 = vmatprep.subr.mxu0 0.0
    %929 = vmatpush1.msra.mxu0 0.0
    %930 = vmatprep.subr.mxu0 0.0
    %931 = vmatpush1.msra.mxu0 0.0
    %932 = vmatprep.subr.mxu0 0.0
    %933 = vmatpush1.msra.mxu0 0.0
    %934 = vmatprep.subr.mxu0 0.0
    %935 = vmatpush1.msra.mxu0 0.0
    %936 = vmatprep.subr.mxu0 0.0
    %937 = vmatpush1.msra.mxu0 0.0
    %938 = vmatprep.subr.mxu0 0.0
    %939 = vmatpush1.msra.mxu0 0.0
    %940 = vmatprep.subr.mxu0 0.0
    %941 = vmatpush1.msra.mxu0 0.0
    %942 = vmatprep.subr.mxu0 0.0
    %943 = vmatpush1.msra.mxu0 0.0
    %944 = vmatprep.subr.mxu0 0.0
    %945 = vmatpush1.msra.mxu0 0.0
    %946 = vmatprep.subr.mxu0 0.0
    %947 = vmatpush1.msra.mxu0 0.0
    %948 = vmatprep.subr.mxu0 0.0
    %949 = vmatpush1.msra.mxu0 0.0
    %950 = vmatprep.subr.mxu0 0.0
    %951 = vmatpush1.msra.mxu0 0.0
    %952 = vmatprep.subr.mxu0 0.0
    %953 = vmatpush1.msra.mxu0 0.0
    %954 = vmatprep.subr.mxu0 0.0
    %955 = vmatpush1.msra.mxu0 0.0
    %956 = vmatprep.subr.mxu0 0.0
    %957 = vmatpush1.msra.mxu0 0.0
    %958 = vmatprep.subr.mxu0 0.0
    %959 = vmatpush1.msra.mxu0 0.0
    %960 = vmatprep.subr.mxu0 0.0
    %961 = vmatpush1.msra.mxu0 0.0
    %962 = vmatprep.mubr.f32.mxu0 0.0
    %963 = vmatmul.mubr.f32.gmra.mrb[0].mxu0 %v893
    %v964 = vpop.f32.mrb[0].mxu0
    %v965 = vadd.f32 0.0, %v964
    %v966 = vpop.f32.mrb[0].mxu0
    %967 = vmatprep.mubr.f32.mxu0 0.0
    %968 = vmatmul.mubr.f32.gmra.mrb[0].mxu0 %v896
    %v969 = vpop.f32.mrb[0].mxu0
    %v970 = vadd.f32 0.0, %v969
    %v971 = vpop.f32.mrb[0].mxu0
    %972 = vdwg.mxu0
    %v974 = vsel %vm129, %v602, 0
    %v977 = vsel %vm129, %v603, 0
    %979 = vmatprep.subr.mxu0 0.0
    %980 = vmatpush1.msra.mxu0 %v604
    %981 = vmatprep.subr.mxu0 0.0
    %982 = vmatpush1.msra.mxu0 %v605
    %983 = vmatprep.subr.mxu0 0.0
    %984 = vmatpush1.msra.mxu0 %v606
    %985 = vmatprep.subr.mxu0 0.0
    %986 = vmatpush1.msra.mxu0 %v607
    %987 = vmatprep.subr.mxu0 0.0
    %988 = vmatpush1.msra.mxu0 0.0
    %989 = vmatprep.subr.mxu0 0.0
    %990 = vmatpush1.msra.mxu0 0.0
    %991 = vmatprep.subr.mxu0 0.0
    %992 = vmatpush1.msra.mxu0 0.0
    %993 = vmatprep.subr.mxu0 0.0
    %994 = vmatpush1.msra.mxu0 0.0
    %995 = vmatprep.subr.mxu0 0.0
    %996 = vmatpush1.msra.mxu0 0.0
    %997 = vmatprep.subr.mxu0 0.0
    %998 = vmatpush1.msra.mxu0 0.0
    %999 = vmatprep.subr.mxu0 0.0
    %1000 = vmatpush1.msra.mxu0 0.0
    %1001 = vmatprep.subr.mxu0 0.0
    %1002 = vmatpush1.msra.mxu0 0.0
    %1003 = vmatprep.subr.mxu0 0.0
    %1004 = vmatpush1.msra.mxu0 0.0
    %1005 = vmatprep.subr.mxu0 0.0
    %1006 = vmatpush1.msra.mxu0 0.0
    %1007 = vmatprep.subr.mxu0 0.0
    %1008 = vmatpush1.msra.mxu0 0.0
    %1009 = vmatprep.subr.mxu0 0.0
    %1010 = vmatpush1.msra.mxu0 0.0
    %1011 = vmatprep.subr.mxu0 0.0
    %1012 = vmatpush1.msra.mxu0 0.0
    %1013 = vmatprep.subr.mxu0 0.0
    %1014 = vmatpush1.msra.mxu0 0.0
    %1015 = vmatprep.subr.mxu0 0.0
    %1016 = vmatpush1.msra.mxu0 0.0
    %1017 = vmatprep.subr.mxu0 0.0
    %1018 = vmatpush1.msra.mxu0 0.0
    %1019 = vmatprep.subr.mxu0 0.0
    %1020 = vmatpush1.msra.mxu0 0.0
    %1021 = vmatprep.subr.mxu0 0.0
    %1022 = vmatpush1.msra.mxu0 0.0
    %1023 = vmatprep.subr.mxu0 0.0
    %1024 = vmatpush1.msra.mxu0 0.0
    %1025 = vmatprep.subr.mxu0 0.0
    %1026 = vmatpush1.msra.mxu0 0.0
    %1027 = vmatprep.subr.mxu0 0.0
    %1028 = vmatpush1.msra.mxu0 0.0
    %1029 = vmatprep.subr.mxu0 0.0
    %1030 = vmatpush1.msra.mxu0 0.0
    %1031 = vmatprep.subr.mxu0 0.0
    %1032 = vmatpush1.msra.mxu0 0.0
    %1033 = vmatprep.subr.mxu0 0.0
    %1034 = vmatpush1.msra.mxu0 0.0
    %1035 = vmatprep.subr.mxu0 0.0
    %1036 = vmatpush1.msra.mxu0 0.0
    %1037 = vmatprep.subr.mxu0 0.0
    %1038 = vmatpush1.msra.mxu0 0.0
    %1039 = vmatprep.subr.mxu0 0.0
    %1040 = vmatpush1.msra.mxu0 0.0
    %1041 = vmatprep.subr.mxu0 0.0
    %1042 = vmatpush1.msra.mxu0 0.0
    %1043 = vmatprep.mubr.f32.mxu0 0.0
    %1044 = vmatmul.mubr.f32.gmra.mrb[0].mxu0 %v974
    %v1045 = vpop.f32.mrb[0].mxu0
    %v1046 = vadd.f32 %v965, %v1045
    %v1047 = vpop.f32.mrb[0].mxu0
    %1048 = vmatprep.mubr.f32.mxu0 0.0
    %1049 = vmatmul.mubr.f32.gmra.mrb[0].mxu0 %v977
    %v1050 = vpop.f32.mrb[0].mxu0
    %v1051 = vadd.f32 %v970, %v1050
    %v1052 = vpop.f32.mrb[0].mxu0
    %1053 = vdwg.mxu0
    %v1054 = vlaneseq
    %v1055 = vshrl.u32 %v1054, 7
    %v1056 = vsub.s32 0, %v1055
    %v1057 = vrot.slane %v37, %v1056
    %v1058 = vadd.f32 %v1046, %v1057
    %v1059 = vadd.f32 %v1051, %v1057
    %v1060 = vmax.f32 %v1058, 0.0
    %v1061 = vmax.f32 %v1059, 0.0
    %v1062 = vlaneseq
    %v1063 = vshrl.u32 %v1062, 7
    %v1064 = vsub.s32 0, %v1063
    %v1065 = vrot.slane %v38, %v1064
    %v1067 = vsel %vm129, %v1060, 0
    %v1070 = vsel %vm129, %v1061, 0
    %1072 = vmatprep.subr.mxu0 0.0
    %1073 = vmatpush1.msra.mxu0 %v32
    %1074 = vmatprep.subr.mxu0 0.0
    %1075 = vmatpush1.msra.mxu0 %v33
    %1076 = vmatprep.subr.mxu0 0.0
    %1077 = vmatpush1.msra.mxu0 %v34
    %1078 = vmatprep.subr.mxu0 0.0
    %1079 = vmatpush1.msra.mxu0 %v35
    %1080 = vmatprep.subr.mxu0 0.0
    %1081 = vmatpush1.msra.mxu0 0.0
    %1082 = vmatprep.subr.mxu0 0.0
    %1083 = vmatpush1.msra.mxu0 0.0
    %1084 = vmatprep.subr.mxu0 0.0
    %1085 = vmatpush1.msra.mxu0 0.0
    %1086 = vmatprep.subr.mxu0 0.0
    %1087 = vmatpush1.msra.mxu0 0.0
    %1088 = vmatprep.subr.mxu0 0.0
    %1089 = vmatpush1.msra.mxu0 0.0
    %1090 = vmatprep.subr.mxu0 0.0
    %1091 = vmatpush1.msra.mxu0 0.0
    %1092 = vmatprep.subr.mxu0 0.0
    %1093 = vmatpush1.msra.mxu0 0.0
    %1094 = vmatprep.subr.mxu0 0.0
    %1095 = vmatpush1.msra.mxu0 0.0
    %1096 = vmatprep.subr.mxu0 0.0
    %1097 = vmatpush1.msra.mxu0 0.0
    %1098 = vmatprep.subr.mxu0 0.0
    %1099 = vmatpush1.msra.mxu0 0.0
    %1100 = vmatprep.subr.mxu0 0.0
    %1101 = vmatpush1.msra.mxu0 0.0
    %1102 = vmatprep.subr.mxu0 0.0
    %1103 = vmatpush1.msra.mxu0 0.0
    %1104 = vmatprep.subr.mxu0 0.0
    %1105 = vmatpush1.msra.mxu0 0.0
    %1106 = vmatprep.subr.mxu0 0.0
    %1107 = vmatpush1.msra.mxu0 0.0
    %1108 = vmatprep.subr.mxu0 0.0
    %1109 = vmatpush1.msra.mxu0 0.0
    %1110 = vmatprep.subr.mxu0 0.0
    %1111 = vmatpush1.msra.mxu0 0.0
    %1112 = vmatprep.subr.mxu0 0.0
    %1113 = vmatpush1.msra.mxu0 0.0
    %1114 = vmatprep.subr.mxu0 0.0
    %1115 = vmatpush1.msra.mxu0 0.0
    %1116 = vmatprep.subr.mxu0 0.0
    %1117 = vmatpush1.msra.mxu0 0.0
    %1118 = vmatprep.subr.mxu0 0.0
    %1119 = vmatpush1.msra.mxu0 0.0
    %1120 = vmatprep.subr.mxu0 0.0
    %1121 = vmatpush1.msra.mxu0 0.0
    %1122 = vmatprep.subr.mxu0 0.0
    %1123 = vmatpush1.msra.mxu0 0.0
    %1124 = vmatprep.subr.mxu0 0.0
    %1125 = vmatpush1.msra.mxu0 0.0
    %1126 = vmatprep.subr.mxu0 0.0
    %1127 = vmatpush1.msra.mxu0 0.0
    %1128 = vmatprep.subr.mxu0 0.0
    %1129 = vmatpush1.msra.mxu0 0.0
    %1130 = vmatprep.subr.mxu0 0.0
    %1131 = vmatpush1.msra.mxu0 0.0
    %1132 = vmatprep.subr.mxu0 0.0
    %1133 = vmatpush1.msra.mxu0 0.0
    %1134 = vmatprep.subr.mxu0 0.0
    %1135 = vmatpush1.msra.mxu0 0.0
    %1136 = vmatprep.mubr.f32.mxu0 0.0
    %1137 = vmatmul.mubr.f32.gmra.mrb[0].mxu0 %v1067
    %v1138 = vpop.f32.mrb[0].mxu0
    %v1139 = vadd.f32 %v1065, %v1138
    %v1140 = vpop.f32.mrb[0].mxu0
    %1141 = vmatprep.mubr.f32.mxu0 0.0
    %1142 = vmatmul.mubr.f32.gmra.mrb[0].mxu0 %v1070
    %v1143 = vpop.f32.mrb[0].mxu0
    %v1144 = vadd.f32 %v1065, %v1143
    %v1145 = vpop.f32.mrb[0].mxu0
    %1146 = vdwg.mxu0
    %v1147 = vrot.slane %v1061, 7
    %v1148 = vsel %vm298, %v1147, %v1060
    %v1150 = vrot.slane %v1060, 1
    %v1151 = vsel %vm298, %v1061, %v1150
    %1152 = vrot.lane.b32.xlu0 %v1151, 32
    %v1153 = vpop.permute.xlu0 %1152
    %v1155 = vrot.slane %v1060, 2
    %v1156 = vrot.slane %v1061, 1
    %v1157 = vsel %vm298, %v1156, %v1155
    %1158 = vrot.lane.b32.xlu0 %v1157, 64
    %v1159 = vpop.permute.xlu0 %1158
    %v1161 = vrot.slane %v1060, 3
    %v1162 = vrot.slane %v1061, 2
    %v1163 = vsel %vm298, %v1162, %v1161
    %1164 = vrot.lane.b32.xlu0 %v1163, 96
    %v1165 = vpop.permute.xlu0 %1164
    %v1167 = vrot.slane %v1060, 4
    %v1168 = vrot.slane %v1061, 3
    %v1169 = vsel %vm298, %v1168, %v1167
    %v1171 = vrot.slane %v1060, 5
    %v1172 = vrot.slane %v1061, 4
    %v1173 = vsel %vm298, %v1172, %v1171
    %1174 = vrot.lane.b32.xlu0 %v1173, 32
    %v1175 = vpop.permute.xlu0 %1174
    %v1177 = vrot.slane %v1060, 6
    %v1178 = vrot.slane %v1061, 5
    %v1179 = vsel %vm298, %v1178, %v1177
    %1180 = vrot.lane.b32.xlu0 %v1179, 64
    %v1181 = vpop.permute.xlu0 %1180
    %v1183 = vrot.slane %v1060, 7
    %v1184 = vrot.slane %v1061, 6
    %v1185 = vsel %vm298, %v1184, %v1183
    %1186 = vrot.lane.b32.xlu0 %v1185, 96
    %v1187 = vpop.permute.xlu0 %1186
    %v1189 = vsel %vm129, %v1148, %v1153
    %v1190 = vsel %vm211, %v1189, %v1159
    %vm1191 = vcmask 785408
    %v1192 = vsel %vm1191, %v1190, %v1165
    %v1193 = vsel %vm129, %v1169, %v1175
    %v1194 = vsel %vm211, %v1193, %v1181
    %v1195 = vsel %vm1191, %v1194, %v1187
    %v1198 = vcombine.low %v1192, %v1195
    %v1200 = vunpack.c.l.s4 1983009808
    %v1201 = vunpack.c.0.s8 %v1200
    %v1202 = vlaneseq
    %v1203 = vshrl.u32 %v1202, 7
    %v1204 = vsub.s32 %v1201, %v1203
    %v1205 = vrot.slane %v1198, %v1204
    %1207 = vst [vmem:[#allocation4] sm:$0xf] %v1205
    %v1210 = vrot.slane %v1144, 7
    %v1211 = vsel %vm298, %v1210, %v1139
    %v1213 = vrot.slane %v1139, 1
    %v1214 = vsel %vm298, %v1144, %v1213
    %1215 = vrot.lane.b32.xlu0 %v1214, 8
    %v1216 = vpop.permute.xlu0 %1215
    %v1218 = vrot.slane %v1139, 2
    %v1219 = vrot.slane %v1144, 1
    %v1220 = vsel %vm298, %v1219, %v1218
    %1221 = vrot.lane.b32.xlu0 %v1220, 16
    %v1222 = vpop.permute.xlu0 %1221
    %v1224 = vrot.slane %v1139, 3
    %v1225 = vrot.slane %v1144, 2
    %v1226 = vsel %vm298, %v1225, %v1224
    %1227 = vrot.lane.b32.xlu0 %v1226, 24
    %v1228 = vpop.permute.xlu0 %1227
    %v1230 = vrot.slane %v1139, 4
    %v1231 = vrot.slane %v1144, 3
    %v1232 = vsel %vm298, %v1231, %v1230
    %1233 = vrot.lane.b32.xlu0 %v1232, 32
    %v1234 = vpop.permute.xlu0 %1233
    %v1236 = vrot.slane %v1139, 5
    %v1237 = vrot.slane %v1144, 4
    %v1238 = vsel %vm298, %v1237, %v1236
    %1239 = vrot.lane.b32.xlu0 %v1238, 40
    %v1240 = vpop.permute.xlu0 %1239
    %v1242 = vrot.slane %v1139, 6
    %v1243 = vrot.slane %v1144, 5
    %v1244 = vsel %vm298, %v1243, %v1242
    %1245 = vrot.lane.b32.xlu0 %v1244, 48
    %v1246 = vpop.permute.xlu0 %1245
    %v1248 = vrot.slane %v1139, 7
    %v1249 = vrot.slane %v1144, 6
    %v1250 = vsel %vm298, %v1249, %v1248
    %1251 = vrot.lane.b32.xlu0 %v1250, 56
    %v1252 = vpop.permute.xlu0 %1251
    %v1254 = vsel %vm409, %v1211, %v1216
    %v1255 = vsel %vm45, %v1254, %v1222
    %vm1256 = vcmask 195584
    %v1257 = vsel %vm1256, %v1255, %v1228
    %v1258 = vsel %vm129, %v1257, %v1234
    %vm1259 = vcmask 326656
    %v1260 = vsel %vm1259, %v1258, %v1240
    %vm1261 = vcmask 392192
    %v1262 = vsel %vm1261, %v1260, %v1246
    %vm1263 = vcmask 457728
    %v1264 = vsel %vm1263, %v1262, %v1252
    %vm1265 = vcmask 517120
    %1266 = vst.msk [vmem:[#allocation2] sm:$0x3] %vm1265, %v1264
    // Predicated region
    $region14: #{tpu_custom_call.1} parent=1 // pred_check
      _
    $region15: #{tpu_custom_call.1} parent=1 // pred_check_branch
      %1268 = sbr.rel (0) target = $region17
    $region16: #{tpu_custom_call.1} parent=1 // pred_region
      %s1270 = ssub.s32 32, 32
      %1271 = vsyncadd [#allocation3], %s1270
      %s1273 = sshll.u32 [#allocation2], 4
      %s1274 = int_to_ptr.vmem [resolvable:$true] %s1273
      %1276 = dma.vmem_to_hbm [thread:$0]  %s1274, 32, %s3, [#allocation3]
    $region17: #{tpu_custom_call.1} parent=1 // pred_fallthru
      _
    // Predicated region
    $region18: #{tpu_custom_call.1} parent=1 // pred_check
      _
    $region19: #{tpu_custom_call.1} parent=1 // pred_check_branch
      %1278 = sbr.rel (0) target = $region21
    $region20: #{tpu_custom_call.1} parent=1 // pred_region
      %s1280 = ssub.s32 64, 64
      %1281 = vsyncadd [#allocation5], %s1280
      %s1283 = sshll.u32 [#allocation4], 4
      %s1284 = int_to_ptr.vmem [resolvable:$true] %s1283
      %1286 = dma.vmem_to_hbm [thread:$0]  %s1284, 64, %s4, [#allocation5]
    $region21: #{tpu_custom_call.1} parent=1 // pred_fallthru
      _
    // Predicated region
    $region22: #{tpu_custom_call.1} parent=1 // pred_check
      _
    $region23: #{tpu_custom_call.1} parent=1 // pred_check_branch
      %1288 = sbr.rel (0) target = $region25
    $region24: #{tpu_custom_call.1} parent=1 // pred_region
      %1289 = dma.done [#allocation3], 32
    $region25: #{tpu_custom_call.1} parent=1 // pred_fallthru
      _
    // Predicated region
    $region26: #{tpu_custom_call.1} parent=1 // pred_check
      _
    $region27: #{tpu_custom_call.1} parent=1 // pred_check_branch
      %1291 = sbr.rel (0) target = $region29
    $region28: #{tpu_custom_call.1} parent=1 // pred_region
      %1292 = dma.done [#allocation5], 64
    $region29: #{tpu_custom_call.1} parent=1 // pred_fallthru
      _
    %1293 = vsyncpa [#allocation3], 1
    %1294 = vsyncpa [#allocation5], 1

</llo_original>
